<compile_context>
chip_gen: v7x
topology: tpu7x:2x2x1
jax: 0.10.0
libtpu: 0.0.40
codegen_flags: <defaults>
</compile_context>

<pallas_src>
import functools

import jax
import jax.numpy as jnp
from jax import lax
from jax.experimental import pallas as pl
from jax.experimental.pallas import tpu as pltpu


def _layer_norm(y, gamma, beta, eps):
    mu = jnp.mean(y, axis=-1, keepdims=True)
    var = jnp.mean((y - mu) ** 2, axis=-1, keepdims=True)
    return (y - mu) * lax.rsqrt(var + eps) * gamma + beta


def _encoder_layer_kernel(
    x_ref,        # (S, D)   full-sequence input for this batch row (f32)
    wqkv_ref,     # (D, 3D)  fused [Wq | Wk | Wv]   (compute dtype)
    bqkv_ref,     # (1, 3D)  fused [bq | bk | bv]   (f32)
    wo_ref,       # (D, D)   attention output projection (compute dtype)
    vec_ref,      # (6, D)   rows: bo, ln1_g, ln1_b, ln2_g, ln2_b, bf2 (f32)
    w1_ref,       # (D, F)   MLP first linear (compute dtype)
    bf1_ref,      # (1, F)   MLP first bias (f32)
    w2_ref,       # (F, D)   MLP second linear (compute dtype)
    out_ref,      # (tq, D)  output tile (f32)
    kv_ref,       # (S, 2D)  VMEM scratch: cached [K | V] for this batch row
    *, eps, scale, compute_dtype,
):
    f32 = jnp.float32
    cdt = compute_dtype
    D = wo_ref.shape[0]
    tq = out_ref.shape[0]
    i = pl.program_id(1)

    # ---- K/V projection for the whole sequence: once per batch row ----------
    @pl.when(i == 0)
    def _():
        xkv = x_ref[...].astype(cdt)                               # (S, D)
        kv = jnp.dot(xkv, wqkv_ref[:, D:3 * D],
                     preferred_element_type=f32) + bqkv_ref[0:1, D:3 * D]
        kv_ref[...] = kv.astype(cdt)                               # (S, 2D)

    # ---- Q projection for this query tile only -------------------------------
    row0 = pl.multiple_of(i * tq, tq)
    xq = x_ref[pl.ds(row0, tq), :]                                 # (tq, D) f32
    q = jnp.dot(xq.astype(cdt), wqkv_ref[:, 0:D],
                preferred_element_type=f32) + bqkv_ref[0:1, 0:D]
    q = q * scale                    # fold 1/sqrt(D) into q (tq*D mults, not tq*S)

    k = kv_ref[:, 0:D]                                             # (S, D) cdt
    v = kv_ref[:, D:2 * D]                                         # (S, D) cdt

    # ---- single-head attention: s = q @ k^T (no transpose), online-free softmax
    s = lax.dot_general(q.astype(cdt), k,
                        dimension_numbers=(((1,), (1,)), ((), ())),
                        preferred_element_type=f32)                # (tq, S) f32
    m = jnp.max(s, axis=-1, keepdims=True)
    p = jnp.exp(s - m)
    denom = jnp.sum(p, axis=-1, keepdims=True)
    p = p * pl.reciprocal(denom, approx=True)                      # EUP slot

    attn = jnp.dot(p.astype(cdt), v, preferred_element_type=f32)   # (tq, D)
    mha = jnp.dot(attn.astype(cdt), wo_ref[...],
                  preferred_element_type=f32) + vec_ref[0:1, :]    # + bo

    # dropout p=0.0 -> identity; post-norm (norm_first=False)
    x1 = _layer_norm(xq + mha, vec_ref[1:2, :], vec_ref[2:3, :], eps)

    # ---- feed-forward MLP: Linear -> ReLU -> Linear ---------------------------
    h = jnp.dot(x1.astype(cdt), w1_ref[...],
                preferred_element_type=f32) + bf1_ref[...]
    h = jnp.maximum(h, 0.0)
    ff = jnp.dot(h.astype(cdt), w2_ref[...],
                 preferred_element_type=f32) + vec_ref[5:6, :]     # + bf2

    out_ref[...] = _layer_norm(x1 + ff, vec_ref[3:4, :], vec_ref[4:5, :], eps)


def encoder_layer_pallas(x, params, *, eps=1e-6, tq=None,
                         compute_dtype=jnp.float32):
    """x: (B, S, D) float32. Returns (B, S, D) float32."""
    B, S, D = x.shape
    F = params["w1"].shape[1]
    scale = 1.0 / (float(D) ** 0.5)          # single head -> head_dim == D

    if tq is None:
        tq = S if S <= 128 else 128
    assert S % tq == 0, "sequence length must be divisible by the query tile"
    nq = S // tq

    cdt = compute_dtype
    # Host-side parameter fusion / packing (fewer, lane-dense kernel inputs).
    wqkv = jnp.concatenate([params["wq"], params["wk"], params["wv"]],
                           axis=1).astype(cdt)                       # (D, 3D)
    bqkv = jnp.concatenate([params["bq"], params["bk"], params["bv"]],
                           axis=1).astype(jnp.float32)               # (1, 3D)
    wo = params["wo"].astype(cdt)
    w1 = params["w1"].astype(cdt)
    w2 = params["w2"].astype(cdt)
    bf1 = params["bf1"].astype(jnp.float32)
    vecs = jnp.concatenate(
        [params["bo"], params["g1"], params["beta1"],
         params["g2"], params["beta2"], params["bf2"]],
        axis=0).astype(jnp.float32)                                  # (6, D)

    weights = [wqkv, bqkv, wo, vecs, w1, bf1, w2]

    def full_spec(a):
        return pl.BlockSpec(a.shape, lambda b, i: (0,) * a.ndim)

    # Explicit VMEM budget: weights + double-buffered x / out blocks + the
    # K|V scratch + intermediates, doubled for headroom, capped at 64 MiB
    # (v7x VMEM is 64 MiB per TensorCore).
    cbytes = jnp.dtype(cdt).itemsize
    weight_bytes = sum(int(a.size) * a.dtype.itemsize for a in weights)
    act_bytes = 4 * (S * D + tq * D)                       # x row + out tile
    scratch_bytes = cbytes * S * 2 * D                     # cached K|V
    inter_bytes = 4 * (2 * S * D + 2 * tq * S + 2 * tq * F + 10 * tq * D)
    vmem_limit = int(min(max(2 * (weight_bytes + 2 * act_bytes
                                  + scratch_bytes + inter_bytes),
                             32 * 1024 * 1024),
                         64 * 1024 * 1024))

    kernel = functools.partial(_encoder_layer_kernel, eps=eps, scale=scale,
                               compute_dtype=cdt)

    return pl.pallas_call(
        kernel,
        out_shape=jax.ShapeDtypeStruct((B, S, D), jnp.float32),
        grid_spec=pltpu.PrefetchScalarGridSpec(
            num_scalar_prefetch=0,
            grid=(B, nq),
            in_specs=[
                # full-sequence x for this batch row (re-used across all q-tiles)
                pl.BlockSpec((None, S, D), lambda b, i: (b, 0, 0)),
            ] + [full_spec(a) for a in weights],
            out_specs=pl.BlockSpec((None, tq, D), lambda b, i: (b, i, 0)),
            scratch_shapes=[pltpu.VMEM((S, 2 * D), cdt)],
        ),
        compiler_params=pltpu.CompilerParams(
            dimension_semantics=("parallel", "arbitrary"),
            vmem_limit_bytes=vmem_limit),
    )(x, *weights)


def _reference(x, p, eps=1e-6):
    """Pure-JAX f32 reference for correctness checking."""
    def ln(y, g, b):
        mu = jnp.mean(y, axis=-1, keepdims=True)
        var = jnp.mean((y - mu) ** 2, axis=-1, keepdims=True)
        return (y - mu) / jnp.sqrt(var + eps) * g + b

    D = x.shape[-1]
    q = x @ p["wq"] + p["bq"]
    k = x @ p["wk"] + p["bk"]
    v = x @ p["wv"] + p["bv"]
    s = jnp.einsum("bqd,bkd->bqk", q, k) / jnp.sqrt(D).astype(x.dtype)
    a = jax.nn.softmax(s, axis=-1)
    mha = jnp.einsum("bqk,bkd->bqd", a, v) @ p["wo"] + p["bo"]
    x1 = ln(x + mha, p["g1"], p["beta1"])
    h = jax.nn.relu(x1 @ p["w1"] + p["bf1"])
    ff = h @ p["w2"] + p["bf2"]
    return ln(x1 + ff, p["g2"], p["beta2"])


if __name__ == "__main__":
    # Lane-dense shapes (D, F multiples of 128); two query tiles per batch elem
    # so the cached-K/V path (pl.when on program_id(1) == 0) is exercised.
    B, S, D, F = 2, 128, 128, 256
    key = jax.random.PRNGKey(0)
    keys = jax.random.split(key, 12)

    def init_w(k, shape, fan_in):
        return (jax.random.normal(k, shape, jnp.float32) /
                jnp.sqrt(fan_in)).astype(jnp.float32)

    params = {
        "wq": init_w(keys[0], (D, D), D), "bq": jnp.zeros((1, D), jnp.float32),
        "wk": init_w(keys[1], (D, D), D), "bk": jnp.zeros((1, D), jnp.float32),
        "wv": init_w(keys[2], (D, D), D), "bv": jnp.zeros((1, D), jnp.float32),
        "wo": init_w(keys[3], (D, D), D), "bo": jnp.zeros((1, D), jnp.float32),
        "g1": jnp.ones((1, D), jnp.float32), "beta1": jnp.zeros((1, D), jnp.float32),
        "g2": jnp.ones((1, D), jnp.float32), "beta2": jnp.zeros((1, D), jnp.float32),
        "w1": init_w(keys[4], (D, F), D),
        "bf1": 0.01 * jax.random.normal(keys[5], (1, F), jnp.float32),
        "w2": init_w(keys[6], (F, D), F),
        "bf2": 0.01 * jax.random.normal(keys[7], (1, D), jnp.float32),
    }

    x = jax.random.normal(keys[8], (B, S, D), jnp.float32)
    ref = _reference(x, params, eps=1e-6)

    # f32 MXU operands: close to the pure-JAX reference (tolerance loosened
    # slightly for the EUP approx reciprocal in the softmax).
    out_f32 = jax.block_until_ready(
        encoder_layer_pallas(x, params, eps=1e-6, tq=64,
                             compute_dtype=jnp.float32))
    assert out_f32.shape == (B, S, D)
    assert jnp.allclose(out_f32, ref, rtol=1e-2, atol=1e-2), \
        "f32 Pallas output mismatch vs reference"

    # bf16 MXU operands with f32 accumulation: the fast path on v5e/v6e/v7x.
    out_bf16 = jax.block_until_ready(
        encoder_layer_pallas(x, params, eps=1e-6, tq=64,
                             compute_dtype=jnp.bfloat16))
    assert out_bf16.shape == (B, S, D)
    assert float(jnp.max(jnp.abs(out_bf16 - ref))) < 0.2, \
        "bf16 Pallas output diverged from reference"

    print("KERNEL_OK")
</pallas_src>

<mosaic_0001>
module attributes {stable_mosaic.version = 11 : i64} {
  func.func @_encoder_layer_kernel(%arg0: i32, %arg1: i32, %arg2: memref<1x128x128xf32, #tpu.memory_space<vmem>>, %arg3: memref<128x384xf32, #tpu.memory_space<vmem>>, %arg4: memref<1x384xf32, #tpu.memory_space<vmem>>, %arg5: memref<128x128xf32, #tpu.memory_space<vmem>>, %arg6: memref<6x128xf32, #tpu.memory_space<vmem>>, %arg7: memref<128x256xf32, #tpu.memory_space<vmem>>, %arg8: memref<1x256xf32, #tpu.memory_space<vmem>>, %arg9: memref<256x128xf32, #tpu.memory_space<vmem>>, %arg10: memref<1x64x128xf32, #tpu.memory_space<vmem>>, %arg11: memref<128x256xf32, #tpu.memory_space<vmem>>) attributes {dimension_semantics = [#tpu.dimension_semantics<parallel>, #tpu.dimension_semantics<arbitrary>], iteration_bounds = array<i64: 2, 2>, scalar_prefetch = 0 : i64, scratch_operands = 1 : i64, tpu.core_type = #tpu.core_type<tc>, window_params = [{transform_indices = @transform_0, window_bounds = array<i64: 1, 128, 128>}, {pipeline_mode = #tpu.pipeline_mode<synchronous>, transform_indices = @transform_1, window_bounds = array<i64: 128, 384>}, {pipeline_mode = #tpu.pipeline_mode<synchronous>, transform_indices = @transform_2, window_bounds = array<i64: 1, 384>}, {pipeline_mode = #tpu.pipeline_mode<synchronous>, transform_indices = @transform_3, window_bounds = array<i64: 128, 128>}, {pipeline_mode = #tpu.pipeline_mode<synchronous>, transform_indices = @transform_4, window_bounds = array<i64: 6, 128>}, {pipeline_mode = #tpu.pipeline_mode<synchronous>, transform_indices = @transform_5, window_bounds = array<i64: 128, 256>}, {pipeline_mode = #tpu.pipeline_mode<synchronous>, transform_indices = @transform_6, window_bounds = array<i64: 1, 256>}, {pipeline_mode = #tpu.pipeline_mode<synchronous>, transform_indices = @transform_7, window_bounds = array<i64: 256, 128>}, {transform_indices = @transform_8, window_bounds = array<i64: 1, 64, 128>}]} {
    %c0_i32 = arith.constant 0 : i32
    %0 = arith.cmpi eq, %arg1, %c0_i32 : i32
    %1 = arith.extui %0 : i1 to i32
    %c0_i32_0 = arith.constant 0 : i32
    %2 = arith.cmpi ne, %1, %c0_i32_0 : i32
    scf.if %2 {
      %c0_46 = arith.constant 0 : index
      %c0_47 = arith.constant 0 : index
      %c0_48 = arith.constant 0 : index
      %99 = vector.load %arg2[%c0_46, %c0_47, %c0_48] : memref<1x128x128xf32, #tpu.memory_space<vmem>>, vector<1x128x128xf32>
      %100 = vector.shape_cast %99 : vector<1x128x128xf32> to vector<128x128xf32>
      %c0_49 = arith.constant 0 : index
      %c128_50 = arith.constant 128 : index
      %101 = vector.load %arg3[%c0_49, %c128_50] : memref<128x384xf32, #tpu.memory_space<vmem>>, vector<128x256xf32>
      %cst_51 = arith.constant dense<0.000000e+00> : vector<128x256xf32>
      %102 = tpu.matmul %100, %101, %cst_51 {dimension_numbers = #tpu.dot_dimension_numbers<[1], [0], [0], [1], [0, 0, 1, 1], [], []>} : vector<128x128xf32>, vector<128x256xf32>, vector<128x256xf32> -> vector<128x256xf32>
      %c0_52 = arith.constant 0 : index
      %c128_53 = arith.constant 128 : index
      %103 = vector.load %arg4[%c0_52, %c128_53] : memref<1x384xf32, #tpu.memory_space<vmem>>, vector<1x256xf32>
      %104 = vector.broadcast %103 : vector<1x256xf32> to vector<128x256xf32>
      %105 = arith.addf %102, %104 : vector<128x256xf32>
      %c0_54 = arith.constant 0 : index
      %c0_55 = arith.constant 0 : index
      %106 = vector.load %arg11[%c0_54, %c0_55] : memref<128x256xf32, #tpu.memory_space<vmem>>, vector<128x256xf32>
      tpu.vector_store %arg11[%c0_54, %c0_55], %105 {strides = array<i32>} : memref<128x256xf32, #tpu.memory_space<vmem>>, vector<128x256xf32>,
    } else {
    }
    %c64_i32 = arith.constant 64 : i32
    %3 = arith.muli %arg1, %c64_i32 : i32
    %4 = tpu.assume_multiple %3, 64 : i32
    %c0 = arith.constant 0 : index
    %5 = arith.index_cast %4 : i32 to index
    %c0_1 = arith.constant 0 : index
    %6 = vector.load %arg2[%c0, %5, %c0_1] : memref<1x128x128xf32, #tpu.memory_space<vmem>>, vector<1x64x128xf32>
    %7 = vector.shape_cast %6 : vector<1x64x128xf32> to vector<64x128xf32>
    %c0_2 = arith.constant 0 : index
    %c0_3 = arith.constant 0 : index
    %8 = vector.load %arg3[%c0_2, %c0_3] : memref<128x384xf32, #tpu.memory_space<vmem>>, vector<128x128xf32>
    %cst = arith.constant dense<0.000000e+00> : vector<64x128xf32>
    %9 = tpu.matmul %7, %8, %cst {dimension_numbers = #tpu.dot_dimension_numbers<[1], [0], [0], [1], [0, 0, 1, 1], [], []>} : vector<64x128xf32>, vector<128x128xf32>, vector<64x128xf32> -> vector<64x128xf32>
    %c0_4 = arith.constant 0 : index
    %c0_5 = arith.constant 0 : index
    %10 = vector.load %arg4[%c0_4, %c0_5] : memref<1x384xf32, #tpu.memory_space<vmem>>, vector<1x128xf32>
    %11 = vector.broadcast %10 : vector<1x128xf32> to vector<64x128xf32>
    %12 = arith.addf %9, %11 : vector<64x128xf32>
    %cst_6 = arith.constant 0.0883883461 : f32
    %13 = vector.broadcast %cst_6 : f32 to vector<64x128xf32>
    %14 = arith.mulf %12, %13 : vector<64x128xf32>
    %c0_7 = arith.constant 0 : index
    %c0_8 = arith.constant 0 : index
    %15 = vector.load %arg11[%c0_7, %c0_8] : memref<128x256xf32, #tpu.memory_space<vmem>>, vector<128x128xf32>
    %c0_9 = arith.constant 0 : index
    %c128 = arith.constant 128 : index
    %16 = vector.load %arg11[%c0_9, %c128] : memref<128x256xf32, #tpu.memory_space<vmem>>, vector<128x128xf32>
    %cst_10 = arith.constant dense<0.000000e+00> : vector<64x128xf32>
    %17 = tpu.matmul %14, %15, %cst_10 {dimension_numbers = #tpu.dot_dimension_numbers<[1], [1], [0], [0], [0, 0, 1, 0], [], []>} : vector<64x128xf32>, vector<128x128xf32>, vector<64x128xf32> -> vector<64x128xf32>
    %cst_11 = arith.constant dense<0xFF800000> : vector<64xf32>
    %18 = vector.multi_reduction <maximumf>, %17, %cst_11 [1] : vector<64x128xf32> to vector<64xf32>
    %19 = vector.shape_cast %18 : vector<64xf32> to vector<64x1xf32>
    %20 = vector.broadcast %19 : vector<64x1xf32> to vector<64x128xf32>
    %21 = arith.subf %17, %20 : vector<64x128xf32>
    %22 = math.exp %21 : vector<64x128xf32>
    %cst_12 = arith.constant dense<0.000000e+00> : vector<64xf32>
    %23 = vector.multi_reduction <add>, %22, %cst_12 [1] : vector<64x128xf32> to vector<64xf32>
    %24 = vector.shape_cast %23 : vector<64xf32> to vector<64x1xf32>
    %25 = tpu.reciprocal %24 {approx = true} : vector<64x1xf32> -> vector<64x1xf32>
    %26 = vector.broadcast %25 : vector<64x1xf32> to vector<64x128xf32>
    %27 = arith.mulf %22, %26 : vector<64x128xf32>
    %cst_13 = arith.constant dense<0.000000e+00> : vector<64x128xf32>
    %28 = tpu.matmul %27, %16, %cst_13 {dimension_numbers = #tpu.dot_dimension_numbers<[1], [0], [0], [1], [0, 0, 1, 1], [], []>} : vector<64x128xf32>, vector<128x128xf32>, vector<64x128xf32> -> vector<64x128xf32>
    %c0_14 = arith.constant 0 : index
    %c0_15 = arith.constant 0 : index
    %29 = vector.load %arg5[%c0_14, %c0_15] : memref<128x128xf32, #tpu.memory_space<vmem>>, vector<128x128xf32>
    %cst_16 = arith.constant dense<0.000000e+00> : vector<64x128xf32>
    %30 = tpu.matmul %28, %29, %cst_16 {dimension_numbers = #tpu.dot_dimension_numbers<[1], [0], [0], [1], [0, 0, 1, 1], [], []>} : vector<64x128xf32>, vector<128x128xf32>, vector<64x128xf32> -> vector<64x128xf32>
    %c0_17 = arith.constant 0 : index
    %c0_18 = arith.constant 0 : index
    %31 = vector.load %arg6[%c0_17, %c0_18] : memref<6x128xf32, #tpu.memory_space<vmem>>, vector<1x128xf32>
    %32 = vector.broadcast %31 : vector<1x128xf32> to vector<64x128xf32>
    %33 = arith.addf %30, %32 : vector<64x128xf32>
    %34 = arith.addf %7, %33 : vector<64x128xf32>
    %c1 = arith.constant 1 : index
    %c0_19 = arith.constant 0 : index
    %35 = vector.load %arg6[%c1, %c0_19] : memref<6x128xf32, #tpu.memory_space<vmem>>, vector<1x128xf32>
    %c2 = arith.constant 2 : index
    %c0_20 = arith.constant 0 : index
    %36 = vector.load %arg6[%c2, %c0_20] : memref<6x128xf32, #tpu.memory_space<vmem>>, vector<1x128xf32>
    %cst_21 = arith.constant dense<0.000000e+00> : vector<64xf32>
    %37 = vector.multi_reduction <add>, %34, %cst_21 [1] : vector<64x128xf32> to vector<64xf32>
    %38 = vector.shape_cast %37 : vector<64xf32> to vector<64x1xf32>
    %cst_22 = arith.constant 1.280000e+02 : f32
    %39 = vector.broadcast %cst_22 : f32 to vector<64x1xf32>
    %40 = arith.divf %38, %39 : vector<64x1xf32>
    %41 = vector.broadcast %40 : vector<64x1xf32> to vector<64x128xf32>
    %42 = arith.subf %34, %41 : vector<64x128xf32>
    %43 = arith.mulf %42, %42 : vector<64x128xf32>
    %cst_23 = arith.constant dense<0.000000e+00> : vector<64xf32>
    %44 = vector.multi_reduction <add>, %43, %cst_23 [1] : vector<64x128xf32> to vector<64xf32>
    %45 = vector.shape_cast %44 : vector<64xf32> to vector<64x1xf32>
    %cst_24 = arith.constant 1.280000e+02 : f32
    %46 = vector.broadcast %cst_24 : f32 to vector<64x1xf32>
    %47 = arith.divf %45, %46 : vector<64x1xf32>
    %48 = vector.broadcast %40 : vector<64x1xf32> to vector<64x128xf32>
    %49 = arith.subf %34, %48 : vector<64x128xf32>
    %cst_25 = arith.constant 9.99999997E-7 : f32
    %50 = vector.broadcast %cst_25 : f32 to vector<64x1xf32>
    %51 = arith.addf %47, %50 : vector<64x1xf32>
    %52 = math.rsqrt %51 : vector<64x1xf32>
    %53 = vector.broadcast %52 : vector<64x1xf32> to vector<64x128xf32>
    %54 = arith.mulf %49, %53 : vector<64x128xf32>
    %55 = vector.broadcast %35 : vector<1x128xf32> to vector<64x128xf32>
    %56 = arith.mulf %54, %55 : vector<64x128xf32>
    %57 = vector.broadcast %36 : vector<1x128xf32> to vector<64x128xf32>
    %58 = arith.addf %56, %57 : vector<64x128xf32>
    %c0_26 = arith.constant 0 : index
    %c0_27 = arith.constant 0 : index
    %59 = vector.load %arg7[%c0_26, %c0_27] : memref<128x256xf32, #tpu.memory_space<vmem>>, vector<128x256xf32>
    %cst_28 = arith.constant dense<0.000000e+00> : vector<64x256xf32>
    %60 = tpu.matmul %58, %59, %cst_28 {dimension_numbers = #tpu.dot_dimension_numbers<[1], [0], [0], [1], [0, 0, 1, 1], [], []>} : vector<64x128xf32>, vector<128x256xf32>, vector<64x256xf32> -> vector<64x256xf32>
    %c0_29 = arith.constant 0 : index
    %c0_30 = arith.constant 0 : index
    %61 = vector.load %arg8[%c0_29, %c0_30] : memref<1x256xf32, #tpu.memory_space<vmem>>, vector<1x256xf32>
    %62 = vector.broadcast %61 : vector<1x256xf32> to vector<64x256xf32>
    %63 = arith.addf %60, %62 : vector<64x256xf32>
    %cst_31 = arith.constant 0.000000e+00 : f32
    %64 = vector.broadcast %cst_31 : f32 to vector<64x256xf32>
    %65 = arith.maximumf %63, %64 : vector<64x256xf32>
    %c0_32 = arith.constant 0 : index
    %c0_33 = arith.constant 0 : index
    %66 = vector.load %arg9[%c0_32, %c0_33] : memref<256x128xf32, #tpu.memory_space<vmem>>, vector<256x128xf32>
    %cst_34 = arith.constant dense<0.000000e+00> : vector<64x128xf32>
    %67 = tpu.matmul %65, %66, %cst_34 {dimension_numbers = #tpu.dot_dimension_numbers<[1], [0], [0], [1], [0, 0, 1, 1], [], []>} : vector<64x256xf32>, vector<256x128xf32>, vector<64x128xf32> -> vector<64x128xf32>
    %c5 = arith.constant 5 : index
    %c0_35 = arith.constant 0 : index
    %68 = vector.load %arg6[%c5, %c0_35] : memref<6x128xf32, #tpu.memory_space<vmem>>, vector<1x128xf32>
    %69 = vector.broadcast %68 : vector<1x128xf32> to vector<64x128xf32>
    %70 = arith.addf %67, %69 : vector<64x128xf32>
    %71 = arith.addf %58, %70 : vector<64x128xf32>
    %c3 = arith.constant 3 : index
    %c0_36 = arith.constant 0 : index
    %72 = vector.load %arg6[%c3, %c0_36] : memref<6x128xf32, #tpu.memory_space<vmem>>, vector<1x128xf32>
    %c4 = arith.constant 4 : index
    %c0_37 = arith.constant 0 : index
    %73 = vector.load %arg6[%c4, %c0_37] : memref<6x128xf32, #tpu.memory_space<vmem>>, vector<1x128xf32>
    %cst_38 = arith.constant dense<0.000000e+00> : vector<64xf32>
    %74 = vector.multi_reduction <add>, %71, %cst_38 [1] : vector<64x128xf32> to vector<64xf32>
    %75 = vector.shape_cast %74 : vector<64xf32> to vector<64x1xf32>
    %cst_39 = arith.constant 1.280000e+02 : f32
    %76 = vector.broadcast %cst_39 : f32 to vector<64x1xf32>
    %77 = arith.divf %75, %76 : vector<64x1xf32>
    %78 = vector.broadcast %77 : vector<64x1xf32> to vector<64x128xf32>
    %79 = arith.subf %71, %78 : vector<64x128xf32>
    %80 = arith.mulf %79, %79 : vector<64x128xf32>
    %cst_40 = arith.constant dense<0.000000e+00> : vector<64xf32>
    %81 = vector.multi_reduction <add>, %80, %cst_40 [1] : vector<64x128xf32> to vector<64xf32>
    %82 = vector.shape_cast %81 : vector<64xf32> to vector<64x1xf32>
    %cst_41 = arith.constant 1.280000e+02 : f32
    %83 = vector.broadcast %cst_41 : f32 to vector<64x1xf32>
    %84 = arith.divf %82, %83 : vector<64x1xf32>
    %85 = vector.broadcast %77 : vector<64x1xf32> to vector<64x128xf32>
    %86 = arith.subf %71, %85 : vector<64x128xf32>
    %cst_42 = arith.constant 9.99999997E-7 : f32
    %87 = vector.broadcast %cst_42 : f32 to vector<64x1xf32>
    %88 = arith.addf %84, %87 : vector<64x1xf32>
    %89 = math.rsqrt %88 : vector<64x1xf32>
    %90 = vector.broadcast %89 : vector<64x1xf32> to vector<64x128xf32>
    %91 = arith.mulf %86, %90 : vector<64x128xf32>
    %92 = vector.broadcast %72 : vector<1x128xf32> to vector<64x128xf32>
    %93 = arith.mulf %91, %92 : vector<64x128xf32>
    %94 = vector.broadcast %73 : vector<1x128xf32> to vector<64x128xf32>
    %95 = arith.addf %93, %94 : vector<64x128xf32>
    %c0_43 = arith.constant 0 : index
    %c0_44 = arith.constant 0 : index
    %c0_45 = arith.constant 0 : index
    %96 = vector.load %arg10[%c0_43, %c0_44, %c0_45] : memref<1x64x128xf32, #tpu.memory_space<vmem>>, vector<1x64x128xf32>
    %97 = vector.shape_cast %96 : vector<1x64x128xf32> to vector<64x128xf32>
    %98 = vector.shape_cast %95 : vector<64x128xf32> to vector<1x64x128xf32>
    tpu.vector_store %arg10[%c0_43, %c0_44, %c0_45], %98 {strides = array<i32>} : memref<1x64x128xf32, #tpu.memory_space<vmem>>, vector<1x64x128xf32>,
    return
  }
  func.func @transform_0(%arg0: i32, %arg1: i32) -> (i32, i32, i32) {
    %c0_i32 = arith.constant 0 : i32
    %c0_i32_0 = arith.constant 0 : i32
    %c0_i32_1 = arith.constant 0 : i32
    return %arg0, %c0_i32, %c0_i32_0 : i32, i32, i32
  }
  func.func @transform_1(%arg0: i32, %arg1: i32) -> (i32, i32) {
    %c0_i32 = arith.constant 0 : i32
    %c0_i32_0 = arith.constant 0 : i32
    %c0_i32_1 = arith.constant 0 : i32
    return %c0_i32, %c0_i32_0 : i32, i32
  }
  func.func @transform_2(%arg0: i32, %arg1: i32) -> (i32, i32) {
    %c0_i32 = arith.constant 0 : i32
    %c0_i32_0 = arith.constant 0 : i32
    %c0_i32_1 = arith.constant 0 : i32
    return %c0_i32, %c0_i32_0 : i32, i32
  }
  func.func @transform_3(%arg0: i32, %arg1: i32) -> (i32, i32) {
    %c0_i32 = arith.constant 0 : i32
    %c0_i32_0 = arith.constant 0 : i32
    %c0_i32_1 = arith.constant 0 : i32
    return %c0_i32, %c0_i32_0 : i32, i32
  }
  func.func @transform_4(%arg0: i32, %arg1: i32) -> (i32, i32) {
    %c0_i32 = arith.constant 0 : i32
    %c0_i32_0 = arith.constant 0 : i32
    %c0_i32_1 = arith.constant 0 : i32
    return %c0_i32, %c0_i32_0 : i32, i32
  }
  func.func @transform_5(%arg0: i32, %arg1: i32) -> (i32, i32) {
    %c0_i32 = arith.constant 0 : i32
    %c0_i32_0 = arith.constant 0 : i32
    %c0_i32_1 = arith.constant 0 : i32
    return %c0_i32, %c0_i32_0 : i32, i32
  }
  func.func @transform_6(%arg0: i32, %arg1: i32) -> (i32, i32) {
    %c0_i32 = arith.constant 0 : i32
    %c0_i32_0 = arith.constant 0 : i32
    %c0_i32_1 = arith.constant 0 : i32
    return %c0_i32, %c0_i32_0 : i32, i32
  }
  func.func @transform_7(%arg0: i32, %arg1: i32) -> (i32, i32) {
    %c0_i32 = arith.constant 0 : i32
    %c0_i32_0 = arith.constant 0 : i32
    %c0_i32_1 = arith.constant 0 : i32
    return %c0_i32, %c0_i32_0 : i32, i32
  }
  func.func @transform_8(%arg0: i32, %arg1: i32) -> (i32, i32, i32) {
    %c0_i32 = arith.constant 0 : i32
    %c0_i32_0 = arith.constant 0 : i32
    return %arg0, %arg1, %c0_i32 : i32, i32, i32
  }
}

</mosaic_0001>

<llo_original>
// kernel: tpu_custom_call.1
$region0: #{tpu_custom_call.1}
  #allocation0 [shape = 'u32[]', space=smem, size = 0x4, offset = 0x4, fixed_abs, tag = 'smem constant byte address 0x4 - core index']
  #allocation1 [shape = 'u32[144,128]{1,0:T(1,128)}', space=vmem, size = 0x12000, scoped, tag = 'internal scratch']
  #allocation2 [shape = 'f32[128,256]{1,0:T(8,128)}', space=vmem, size = 0x20000, scoped, tag = 'scratch operand']
  %s0 = inlined_call_operand.hbm [shape: f32[2,128,128], index: 0, kind: input, shape index: {}]
  %s1 = inlined_call_operand.hbm [shape: f32[128,384], index: 1, kind: input, shape index: {}]
  %s2 = inlined_call_operand.vmem [shape: f32[1,384], index: 2, kind: input, shape index: {}]
  %s3 = inlined_call_operand.hbm [shape: f32[128,128], index: 3, kind: input, shape index: {}]
  %s4 = inlined_call_operand.vmem [shape: f32[6,128], index: 4, kind: input, shape index: {}]
  %s5 = inlined_call_operand.hbm [shape: f32[128,256], index: 5, kind: input, shape index: {}]
  %s6 = inlined_call_operand.vmem [shape: f32[1,256], index: 6, kind: input, shape index: {}]
  %s7 = inlined_call_operand.hbm [shape: f32[256,128], index: 7, kind: input, shape index: {}]
  %s8 = inlined_call_operand.hbm [shape: f32[2,128,128], index: 8, kind: output, shape index: {}]
  %s9 = sld [smem:[#allocation0]]
  $region89: #{tpu_custom_call.1} parent=0
    _
  %s11 = ssub.s32 1, %s9
  %s12 = scalar_select 0, %s11, %s9
  $region1: #{tpu_custom_call.1} parent=0
    #allocation3 [shape = 'u8[131072]{0}', space=vmem, size = 0x20000, scoped, tag = 'input window, operand 0']
    #allocation4 [shape = 's32[2]{0}', space=sflag, size = 0x8, scoped, tag = 'scoped memory for tpu_custom_call.1']
    #allocation5 [shape = 's32[2]{0}', space=sflag, size = 0x8, scoped, tag = 'scoped memory for tpu_custom_call.1']
    #allocation6 [shape = 'u8[196608]{0}', space=vmem, size = 0x30000, scoped, tag = 'input window, operand 1, single buffered']
    #allocation7 [shape = 's32[1]{0}', space=sflag, size = 0x4, scoped, tag = 'scoped memory for tpu_custom_call.1']
    #allocation8 [shape = 'u8[65536]{0}', space=vmem, size = 0x10000, scoped, tag = 'input window, operand 3, single buffered']
    #allocation9 [shape = 'u8[131072]{0}', space=vmem, size = 0x20000, scoped, tag = 'input window, operand 5, single buffered']
    #allocation10 [shape = 's32[1]{0}', space=sflag, size = 0x4, scoped, tag = 'scoped memory for tpu_custom_call.1']
    #allocation11 [shape = 'u8[131072]{0}', space=vmem, size = 0x20000, scoped, tag = 'input window, operand 7, single buffered']
    #allocation12 [shape = 'u8[65536]{0}', space=vmem, size = 0x10000, scoped, tag = 'output window, operand 0']
    %13 = vsyncpa [#allocation4], 0
    %s14 = scalar_lea.sflag [#allocation4], 1
    %15 = vsyncpa %s14, 0
    %16 = vsyncpa [#allocation7], 0
    %17 = vsyncpa [#allocation10], 0
    %18 = vsyncpa [#allocation5], 0
    %s19 = scalar_lea.sflag [#allocation5], 1
    %20 = vsyncpa %s19, 0
    loop: start=0, step=1, limit=6
    $region2: #{tpu_custom_call.1} parent=1 // loop_pre_header
      _
    $region3: #{tpu_custom_call.1} parent=1 // loop_header
      %s22 = sphi 0, %s26
      %p23 = scmp.ge.s32.totalorder %s22, 6
      %s29 = sphi 0, %s41
      %s30 = sphi 0, %s37
      %s31 = sphi 0, %s29
      %s32 = sphi 0, %s30
      %s33 = sphi 0, %s31
      %s34 = sphi 0, %s32
      %s44 = sphi 0, %s46
      %s47 = sphi 0, %s44
      %s48 = sphi 0, %s47
      %s64 = sphi 0, %s48
      %s68 = sphi 0, %s68
      %s70 = sphi 0, %s68
      %s71 = sphi 0, %s70
      %s85 = sphi 0, %s71
      %s89 = sphi 0, %s89
      %s91 = sphi 0, %s89
      %s92 = sphi 0, %s91
      %s106 = sphi 0, %s92
      %s110 = sphi 0, %s110
      %s112 = sphi 0, %s110
      %s113 = sphi 0, %s112
      %s127 = sphi 0, %s113
      %s131 = sphi 0, %s131
      %s133 = sphi 0, %s131
      %s134 = sphi 0, %s133
      %s148 = sphi 0, %s134
      %s152 = sphi 0, %s152
      %s154 = sphi 0, %s152
      %s155 = sphi 0, %s154
      %s169 = sphi 0, %s155
      %s173 = sphi 0, %s173
      %s175 = sphi 0, %s173
      %s176 = sphi 0, %s175
      %s190 = sphi 0, %s176
      %s194 = sphi 0, %s194
      %s196 = sphi 0, %s194
      %s197 = sphi 0, %s196
      %s211 = sphi 0, %s197
      %s219 = sphi 0, %s221
      %s222 = sphi 0, %s219
      %s223 = sphi 0, %s222
      %s239 = sphi 0, %s223
    $region4: #{tpu_custom_call.1} parent=1 // loop_header_branch
      %25 = sbr.rel (%p23) target = $region8
    $region5: #{tpu_custom_call.1} parent=1 // loop_body
      %s27 = ssub.s32 %s22, 1
      %s28 = ssub.s32 %s22, 2
      %s35 = sadd.s32 1, %s30
      %p36 = scmp.ge.s32.totalorder %s35, 2
      %s37 = scalar_select %p36, 0, %s35
      %s38 = sadd.s32 1, %s29
      %s39 = scalar_select %p36, %s38, %s29
      %p40 = scmp.ge.s32.totalorder %s39, 2
      %s41 = scalar_select %p40, 0, %s39
      %s42 = ssub.s32 %s29, %s41
      %p43 = scmp.eq.s32.totalorder %s42, 0
      %s45 = sadd.s32 %s44, 1
      %s46 = scalar_select %p43, %s44, %s45
      %p49 = pneg %p43
      %p50 = scmp.eq.s32.totalorder %s22, 3
      %p51 = por %p49, %p50
      %p52 = scmp.ne.s32.totalorder %s44, %s47
      %p53 = scmp.eq.s32.totalorder %s22, 0
      %p54 = por %p52, %p53
      %p55 = scmp.ne.s32.totalorder %s44, %s47
      %p56 = scmp.eq.s32.totalorder %s27, 3
      %p57 = por %p55, %p56
      %p58 = scmp.ne.s32.totalorder %s47, %s48
      %p59 = scmp.eq.s32.totalorder %s27, 0
      %p60 = por %p58, %p59
      %p61 = scmp.ne.s32.totalorder %s47, %s48
      %p62 = scmp.eq.s32.totalorder %s28, 3
      %p63 = por %p61, %p62
      %p65 = scmp.ne.s32.totalorder %s48, %s64
      %p66 = scmp.eq.s32.totalorder %s28, 0
      %p67 = por %p65, %p66
      %s69 = sadd.s32 %s68, 1
      %p72 = scmp.eq.s32.totalorder %s22, 3
      %p73 = scmp.ne.s32.totalorder %s68, %s70
      %p74 = scmp.eq.s32.totalorder %s22, 0
      %p75 = por %p73, %p74
      %p76 = scmp.ne.s32.totalorder %s68, %s70
      %p77 = scmp.eq.s32.totalorder %s27, 3
      %p78 = por %p76, %p77
      %p79 = scmp.ne.s32.totalorder %s70, %s71
      %p80 = scmp.eq.s32.totalorder %s27, 0
      %p81 = por %p79, %p80
      %p82 = scmp.ne.s32.totalorder %s70, %s71
      %p83 = scmp.eq.s32.totalorder %s28, 3
      %p84 = por %p82, %p83
      %p86 = scmp.ne.s32.totalorder %s71, %s85
      %p87 = scmp.eq.s32.totalorder %s28, 0
      %p88 = por %p86, %p87
      %s90 = sadd.s32 %s89, 1
      %p93 = scmp.eq.s32.totalorder %s22, 3
      %p94 = scmp.ne.s32.totalorder %s89, %s91
      %p95 = scmp.eq.s32.totalorder %s22, 0
      %p96 = por %p94, %p95
      %p97 = scmp.ne.s32.totalorder %s89, %s91
      %p98 = scmp.eq.s32.totalorder %s27, 3
      %p99 = por %p97, %p98
      %p100 = scmp.ne.s32.totalorder %s91, %s92
      %p101 = scmp.eq.s32.totalorder %s27, 0
      %p102 = por %p100, %p101
      %p103 = scmp.ne.s32.totalorder %s91, %s92
      %p104 = scmp.eq.s32.totalorder %s28, 3
      %p105 = por %p103, %p104
      %p107 = scmp.ne.s32.totalorder %s92, %s106
      %p108 = scmp.eq.s32.totalorder %s28, 0
      %p109 = por %p107, %p108
      %s111 = sadd.s32 %s110, 1
      %p114 = scmp.eq.s32.totalorder %s22, 3
      %p115 = scmp.ne.s32.totalorder %s110, %s112
      %p116 = scmp.eq.s32.totalorder %s22, 0
      %p117 = por %p115, %p116
      %p118 = scmp.ne.s32.totalorder %s110, %s112
      %p119 = scmp.eq.s32.totalorder %s27, 3
      %p120 = por %p118, %p119
      %p121 = scmp.ne.s32.totalorder %s112, %s113
      %p122 = scmp.eq.s32.totalorder %s27, 0
      %p123 = por %p121, %p122
      %p124 = scmp.ne.s32.totalorder %s112, %s113
      %p125 = scmp.eq.s32.totalorder %s28, 3
      %p126 = por %p124, %p125
      %p128 = scmp.ne.s32.totalorder %s113, %s127
      %p129 = scmp.eq.s32.totalorder %s28, 0
      %p130 = por %p128, %p129
      %s132 = sadd.s32 %s131, 1
      %p135 = scmp.eq.s32.totalorder %s22, 3
      %p136 = scmp.ne.s32.totalorder %s131, %s133
      %p137 = scmp.eq.s32.totalorder %s22, 0
      %p138 = por %p136, %p137
      %p139 = scmp.ne.s32.totalorder %s131, %s133
      %p140 = scmp.eq.s32.totalorder %s27, 3
      %p141 = por %p139, %p140
      %p142 = scmp.ne.s32.totalorder %s133, %s134
      %p143 = scmp.eq.s32.totalorder %s27, 0
      %p144 = por %p142, %p143
      %p145 = scmp.ne.s32.totalorder %s133, %s134
      %p146 = scmp.eq.s32.totalorder %s28, 3
      %p147 = por %p145, %p146
      %p149 = scmp.ne.s32.totalorder %s134, %s148
      %p150 = scmp.eq.s32.totalorder %s28, 0
      %p151 = por %p149, %p150
      %s153 = sadd.s32 %s152, 1
      %p156 = scmp.eq.s32.totalorder %s22, 3
      %p157 = scmp.ne.s32.totalorder %s152, %s154
      %p158 = scmp.eq.s32.totalorder %s22, 0
      %p159 = por %p157, %p158
      %p160 = scmp.ne.s32.totalorder %s152, %s154
      %p161 = scmp.eq.s32.totalorder %s27, 3
      %p162 = por %p160, %p161
      %p163 = scmp.ne.s32.totalorder %s154, %s155
      %p164 = scmp.eq.s32.totalorder %s27, 0
      %p165 = por %p163, %p164
      %p166 = scmp.ne.s32.totalorder %s154, %s155
      %p167 = scmp.eq.s32.totalorder %s28, 3
      %p168 = por %p166, %p167
      %p170 = scmp.ne.s32.totalorder %s155, %s169
      %p171 = scmp.eq.s32.totalorder %s28, 0
      %p172 = por %p170, %p171
      %s174 = sadd.s32 %s173, 1
      %p177 = scmp.eq.s32.totalorder %s22, 3
      %p178 = scmp.ne.s32.totalorder %s173, %s175
      %p179 = scmp.eq.s32.totalorder %s22, 0
      %p180 = por %p178, %p179
      %p181 = scmp.ne.s32.totalorder %s173, %s175
      %p182 = scmp.eq.s32.totalorder %s27, 3
      %p183 = por %p181, %p182
      %p184 = scmp.ne.s32.totalorder %s175, %s176
      %p185 = scmp.eq.s32.totalorder %s27, 0
      %p186 = por %p184, %p185
      %p187 = scmp.ne.s32.totalorder %s175, %s176
      %p188 = scmp.eq.s32.totalorder %s28, 3
      %p189 = por %p187, %p188
      %p191 = scmp.ne.s32.totalorder %s176, %s190
      %p192 = scmp.eq.s32.totalorder %s28, 0
      %p193 = por %p191, %p192
      %s195 = sadd.s32 %s194, 1
      %p198 = scmp.eq.s32.totalorder %s22, 3
      %p199 = scmp.ne.s32.totalorder %s194, %s196
      %p200 = scmp.eq.s32.totalorder %s22, 0
      %p201 = por %p199, %p200
      %p202 = scmp.ne.s32.totalorder %s194, %s196
      %p203 = scmp.eq.s32.totalorder %s27, 3
      %p204 = por %p202, %p203
      %p205 = scmp.ne.s32.totalorder %s196, %s197
      %p206 = scmp.eq.s32.totalorder %s27, 0
      %p207 = por %p205, %p206
      %p208 = scmp.ne.s32.totalorder %s196, %s197
      %p209 = scmp.eq.s32.totalorder %s28, 3
      %p210 = por %p208, %p209
      %p212 = scmp.ne.s32.totalorder %s197, %s211
      %p213 = scmp.eq.s32.totalorder %s28, 0
      %p214 = por %p212, %p213
      %s215 = ssub.s32 %s29, %s41
      %s216 = ssub.s32 %s30, %s37
      %s217 = sor.u32 %s215, %s216
      %p218 = scmp.eq.s32.totalorder %s217, 0
      %s220 = sadd.s32 %s219, 1
      %s221 = scalar_select %p218, %s219, %s220
      %p224 = pneg %p218
      %p225 = scmp.eq.s32.totalorder %s22, 3
      %p226 = por %p224, %p225
      %p227 = scmp.ne.s32.totalorder %s219, %s222
      %p228 = scmp.eq.s32.totalorder %s22, 0
      %p229 = por %p227, %p228
      %p230 = scmp.ne.s32.totalorder %s219, %s222
      %p231 = scmp.eq.s32.totalorder %s27, 3
      %p232 = por %p230, %p231
      %p233 = scmp.ne.s32.totalorder %s222, %s223
      %p234 = scmp.eq.s32.totalorder %s27, 0
      %p235 = por %p233, %p234
      %p236 = scmp.ne.s32.totalorder %s222, %s223
      %p237 = scmp.eq.s32.totalorder %s28, 3
      %p238 = por %p236, %p237
      %p240 = scmp.ne.s32.totalorder %s223, %s239
      %p241 = scmp.eq.s32.totalorder %s28, 0
      %p242 = por %p240, %p241
      %p243 = scmp.le.s32.totalorder 1, %s22
      %p244 = scmp.lt.s32.totalorder %s22, 5
      %p245 = pnand %p243, %p244
      %p246 = pneg %p245
      // Predicated region
      $region9: #{tpu_custom_call.1} parent=5 // pred_check
        _
      $region10: #{tpu_custom_call.1} parent=5 // pred_check_branch
        %248 = sbr.rel (%p245) target = $region12
      $region11: #{tpu_custom_call.1} parent=5 // pred_region
        %s249 = ssub.s32 %s22, 1
        // Predicated region
        $region13: #{tpu_custom_call.1} parent=11 // pred_check
          %p250 = pneg %p81
        $region14: #{tpu_custom_call.1} parent=11 // pred_check_branch
          %252 = sbr.rel (%p250) target = $region16
        $region15: #{tpu_custom_call.1} parent=11 // pred_region
          %s254 = ssub.s32 6144, 6144
          %255 = vsyncadd [#allocation7], %s254
          %s256 = sshll.u32 [#allocation6], 4
          %s257 = int_to_ptr.vmem [resolvable:$true] %s256
          %262 = dma.hbm_to_vmem [thread:$0]  %s1, 6144, %s257, [#allocation7], 384, 384, 24
        $region16: #{tpu_custom_call.1} parent=11 // pred_fallthru
          _
        // Predicated region
        $region17: #{tpu_custom_call.1} parent=11 // pred_check
          %p263 = pneg %p102
        $region18: #{tpu_custom_call.1} parent=11 // pred_check_branch
          %265 = sbr.rel (%p263) target = $region20
        $region19: #{tpu_custom_call.1} parent=11 // pred_region
          _
        $region20: #{tpu_custom_call.1} parent=11 // pred_fallthru
          _
        // Predicated region
        $region21: #{tpu_custom_call.1} parent=11 // pred_check
          %p266 = pneg %p123
        $region22: #{tpu_custom_call.1} parent=11 // pred_check_branch
          %268 = sbr.rel (%p266) target = $region24
        $region23: #{tpu_custom_call.1} parent=11 // pred_region
          %s270 = ssub.s32 2048, 2048
          %271 = vsyncadd [#allocation7], %s270
          %s272 = sshll.u32 [#allocation8], 4
          %s273 = int_to_ptr.vmem [resolvable:$true] %s272
          %278 = dma.hbm_to_vmem [thread:$0]  %s3, 2048, %s273, [#allocation7], 128, 128, 8
        $region24: #{tpu_custom_call.1} parent=11 // pred_fallthru
          _
        // Predicated region
        $region25: #{tpu_custom_call.1} parent=11 // pred_check
          %p279 = pneg %p144
        $region26: #{tpu_custom_call.1} parent=11 // pred_check_branch
          %281 = sbr.rel (%p279) target = $region28
        $region27: #{tpu_custom_call.1} parent=11 // pred_region
          _
        $region28: #{tpu_custom_call.1} parent=11 // pred_fallthru
          _
        // Predicated region
        $region29: #{tpu_custom_call.1} parent=11 // pred_check
          %p282 = pneg %p165
        $region30: #{tpu_custom_call.1} parent=11 // pred_check_branch
          %284 = sbr.rel (%p282) target = $region32
        $region31: #{tpu_custom_call.1} parent=11 // pred_region
          %s286 = ssub.s32 4096, 4096
          %287 = vsyncadd [#allocation10], %s286
          %s288 = sshll.u32 [#allocation9], 4
          %s289 = int_to_ptr.vmem [resolvable:$true] %s288
          %294 = dma.hbm_to_vmem [thread:$0]  %s5, 4096, %s289, [#allocation10], 256, 256, 16
        $region32: #{tpu_custom_call.1} parent=11 // pred_fallthru
          _
        // Predicated region
        $region33: #{tpu_custom_call.1} parent=11 // pred_check
          %p295 = pneg %p186
        $region34: #{tpu_custom_call.1} parent=11 // pred_check_branch
          %297 = sbr.rel (%p295) target = $region36
        $region35: #{tpu_custom_call.1} parent=11 // pred_region
          _
        $region36: #{tpu_custom_call.1} parent=11 // pred_fallthru
          _
        // Predicated region
        $region37: #{tpu_custom_call.1} parent=11 // pred_check
          %p298 = pneg %p207
        $region38: #{tpu_custom_call.1} parent=11 // pred_check_branch
          %300 = sbr.rel (%p298) target = $region40
        $region39: #{tpu_custom_call.1} parent=11 // pred_region
          %s302 = ssub.s32 4096, 4096
          %303 = vsyncadd [#allocation10], %s302
          %s304 = sshll.u32 [#allocation11], 4
          %s305 = int_to_ptr.vmem [resolvable:$true] %s304
          %310 = dma.hbm_to_vmem [thread:$0]  %s7, 4096, %s305, [#allocation10], 128, 128, 8
        $region40: #{tpu_custom_call.1} parent=11 // pred_fallthru
          _
      $region12: #{tpu_custom_call.1} parent=5 // pred_fallthru
        _
      %p311 = scmp.lt.s32.totalorder %s22, 4
      // Predicated region
      $region41: #{tpu_custom_call.1} parent=5 // pred_check
        %p312 = pneg %p311
      $region42: #{tpu_custom_call.1} parent=5 // pred_check_branch
        %314 = sbr.rel (%p312) target = $region44
      $region43: #{tpu_custom_call.1} parent=5 // pred_region
        // Predicated region
        $region45: #{tpu_custom_call.1} parent=43 // pred_check
          %p315 = pneg %p54
        $region46: #{tpu_custom_call.1} parent=43 // pred_check_branch
          %317 = sbr.rel (%p315) target = $region48
        $region47: #{tpu_custom_call.1} parent=43 // pred_region
          %s318 = sand.u32 %s44, 1
          %s319 = scalar_lea.sflag [#allocation4], %s318
          %s320 = sand.u32 %s44, 1
          %s321 = smul.addr %s320, 128
          %s322 = scalar_lea.vmem [#allocation3], %s321
          %s324 = ssub.s32 2048, 2048
          %325 = vsyncadd %s319, %s324
          %s326 = smul.addr %s29, 16
          %s327 = smul.addr %s326, 128
          %s328 = scalar_lea.hbm %s0, %s327
          %s329 = sshll.u32 %s322, 4
          %s330 = int_to_ptr.vmem [resolvable:$true] %s329
          %335 = dma.hbm_to_vmem [thread:$0]  %s328, 2048, %s330, %s319, 128, 128, 8
        $region48: #{tpu_custom_call.1} parent=43 // pred_fallthru
          _
      $region44: #{tpu_custom_call.1} parent=5 // pred_fallthru
        _
      %p336 = scmp.le.s32.totalorder 1, %s22
      %p337 = scmp.lt.s32.totalorder %s22, 5
      %p338 = pnand %p336, %p337
      %p339 = pneg %p338
      // Predicated region
      $region49: #{tpu_custom_call.1} parent=5 // pred_check
        _
      $region50: #{tpu_custom_call.1} parent=5 // pred_check_branch
        %341 = sbr.rel (%p338) target = $region52
      $region51: #{tpu_custom_call.1} parent=5 // pred_region
        %s342 = ssub.s32 %s22, 1
        %s343 = sand.u32 %s47, 1
        %s344 = scalar_lea.sflag [#allocation4], %s343
        %s345 = sand.u32 %s47, 1
        %s346 = smul.addr %s345, 128
        %s347 = scalar_lea.vmem [#allocation3], %s346
        // Predicated region
        $region53: #{tpu_custom_call.1} parent=51 // pred_check
          %p348 = pneg %p60
        $region54: #{tpu_custom_call.1} parent=51 // pred_check_branch
          %350 = sbr.rel (%p348) target = $region56
        $region55: #{tpu_custom_call.1} parent=51 // pred_region
          %351 = dma.done %s344, 2048
        $region56: #{tpu_custom_call.1} parent=51 // pred_fallthru
          _
        // Predicated region
        $region57: #{tpu_custom_call.1} parent=51 // pred_check
          %p352 = pneg %p81
        $region58: #{tpu_custom_call.1} parent=51 // pred_check_branch
          %354 = sbr.rel (%p352) target = $region60
        $region59: #{tpu_custom_call.1} parent=51 // pred_region
          %355 = dma.done [#allocation7], 6144
        $region60: #{tpu_custom_call.1} parent=51 // pred_fallthru
          _
        // Predicated region
        $region61: #{tpu_custom_call.1} parent=51 // pred_check
          %p356 = pneg %p123
        $region62: #{tpu_custom_call.1} parent=51 // pred_check_branch
          %358 = sbr.rel (%p356) target = $region64
        $region63: #{tpu_custom_call.1} parent=51 // pred_region
          %359 = dma.done [#allocation7], 2048
        $region64: #{tpu_custom_call.1} parent=51 // pred_fallthru
          _
        // Predicated region
        $region65: #{tpu_custom_call.1} parent=51 // pred_check
          %p360 = pneg %p165
        $region66: #{tpu_custom_call.1} parent=51 // pred_check_branch
          %362 = sbr.rel (%p360) target = $region68
        $region67: #{tpu_custom_call.1} parent=51 // pred_region
          %363 = dma.done [#allocation10], 4096
        $region68: #{tpu_custom_call.1} parent=51 // pred_fallthru
          _
        // Predicated region
        $region69: #{tpu_custom_call.1} parent=51 // pred_check
          %p364 = pneg %p207
        $region70: #{tpu_custom_call.1} parent=51 // pred_check_branch
          %366 = sbr.rel (%p364) target = $region72
        $region71: #{tpu_custom_call.1} parent=51 // pred_region
          %367 = dma.done [#allocation10], 4096
        $region72: #{tpu_custom_call.1} parent=51 // pred_fallthru
          _
        %s368 = sand.u32 %s47, 1
        %s369 = scalar_lea.sflag [#allocation4], %s368
        %s370 = sand.u32 %s47, 1
        %s371 = smul.addr %s370, 128
        %s372 = scalar_lea.vmem [#allocation3], %s371
        %p373 = pneg %p60
        %p374 = pneg %p57
        %p375 = pneg %p81
        %p376 = pneg %p78
        %p377 = pneg %p102
        %p378 = pneg %p99
        %p379 = pneg %p123
        %p380 = pneg %p120
        %p381 = pneg %p144
        %p382 = pneg %p141
        %p383 = pneg %p165
        %p384 = pneg %p162
        %p385 = pneg %p186
        %p386 = pneg %p183
        %p387 = pneg %p207
        %p388 = pneg %p204
        %p389 = pneg %p235
        %p390 = pneg %p232
        %s391 = sand.u32 %s222, 1
        %s392 = scalar_lea.sflag [#allocation5], %s391
        %s393 = sand.u32 %s222, 1
        %s394 = smul.addr %s393, 64
        %s395 = scalar_lea.vmem [#allocation12], %s394
        %s396 = smul.u32 8, %s32
        %p397 = scmp.eq.s32.totalorder %s32, 0
        // Predicated region
        $region73: #{tpu_custom_call.1} parent=51 // pred_check
          %p398 = pneg %p397
        $region74: #{tpu_custom_call.1} parent=51 // pred_check_branch
          %400 = sbr.rel (%p398) target = $region76
        $region75: #{tpu_custom_call.1} parent=51 // pred_region
          %v401 = vld [vmem:[%s347] sm:$0xff]
          %v402 = vld [vmem:[%s347 + $0x8] sm:$0xff]
          %v403 = vld [vmem:[%s347 + $0x10] sm:$0xff]
          %v404 = vld [vmem:[%s347 + $0x18] sm:$0xff]
          %v405 = vld [vmem:[%s347 + $0x20] sm:$0xff]
          %v406 = vld [vmem:[%s347 + $0x28] sm:$0xff]
          %v407 = vld [vmem:[%s347 + $0x30] sm:$0xff]
          %v408 = vld [vmem:[%s347 + $0x38] sm:$0xff]
          %v409 = vld [vmem:[%s347 + $0x40] sm:$0xff]
          %v410 = vld [vmem:[%s347 + $0x48] sm:$0xff]
          %v411 = vld [vmem:[%s347 + $0x50] sm:$0xff]
          %v412 = vld [vmem:[%s347 + $0x58] sm:$0xff]
          %v413 = vld [vmem:[%s347 + $0x60] sm:$0xff]
          %v414 = vld [vmem:[%s347 + $0x68] sm:$0xff]
          %v415 = vld [vmem:[%s347 + $0x70] sm:$0xff]
          %v416 = vld [vmem:[%s347 + $0x78] sm:$0xff]
          %v417 = vld [vmem:[#allocation6 + $0x8] sm:$0xff]
          %v418 = vld [vmem:[#allocation6 + $0x10] sm:$0xff]
          %v419 = vld [vmem:[#allocation6 + $0x20] sm:$0xff]
          %v420 = vld [vmem:[#allocation6 + $0x28] sm:$0xff]
          %v421 = vld [vmem:[#allocation6 + $0x38] sm:$0xff]
          %v422 = vld [vmem:[#allocation6 + $0x40] sm:$0xff]
          %v423 = vld [vmem:[#allocation6 + $0x50] sm:$0xff]
          %v424 = vld [vmem:[#allocation6 + $0x58] sm:$0xff]
          %v425 = vld [vmem:[#allocation6 + $0x68] sm:$0xff]
          %v426 = vld [vmem:[#allocation6 + $0x70] sm:$0xff]
          %v427 = vld [vmem:[#allocation6 + $0x80] sm:$0xff]
          %v428 = vld [vmem:[#allocation6 + $0x88] sm:$0xff]
          %v429 = vld [vmem:[#allocation6 + $0x98] sm:$0xff]
          %v430 = vld [vmem:[#allocation6 + $0xa0] sm:$0xff]
          %v431 = vld [vmem:[#allocation6 + $0xb0] sm:$0xff]
          %v432 = vld [vmem:[#allocation6 + $0xb8] sm:$0xff]
          %v433 = vld [vmem:[#allocation6 + $0xc8] sm:$0xff]
          %v434 = vld [vmem:[#allocation6 + $0xd0] sm:$0xff]
          %v435 = vld [vmem:[#allocation6 + $0xe0] sm:$0xff]
          %v436 = vld [vmem:[#allocation6 + $0xe8] sm:$0xff]
          %v437 = vld [vmem:[#allocation6 + $0xf8] sm:$0xff]
          %v438 = vld [vmem:[#allocation6 + $0x100] sm:$0xff]
          %v439 = vld [vmem:[#allocation6 + $0x110] sm:$0xff]
          %v440 = vld [vmem:[#allocation6 + $0x118] sm:$0xff]
          %v441 = vld [vmem:[#allocation6 + $0x128] sm:$0xff]
          %v442 = vld [vmem:[#allocation6 + $0x130] sm:$0xff]
          %v443 = vld [vmem:[#allocation6 + $0x140] sm:$0xff]
          %v444 = vld [vmem:[#allocation6 + $0x148] sm:$0xff]
          %v445 = vld [vmem:[#allocation6 + $0x158] sm:$0xff]
          %v446 = vld [vmem:[#allocation6 + $0x160] sm:$0xff]
          %v447 = vld [vmem:[#allocation6 + $0x170] sm:$0xff]
          %v448 = vld [vmem:[#allocation6 + $0x178] sm:$0xff]
          %v449 = vld [vmem:[%s2 + $0x1] sm:$0x3]
          %v451 = vlaneseq
          %v452 = vshrl.u32 %v451, 7
          %v453 = vsub.s32 0, %v452
          %v454 = vrot.slane %v449, %v453
          %v455 = vlaneseq
          %v456 = vshrl.u32 %v455, 7
          %v457 = vsub.s32 1, %v456
          %v458 = vrot.slane %v449, %v457
          %461 = vmatprep.subr.mxu0 %v418
          %462 = vmatpush1.msra.mxu0 %v417
          %463 = vmatprep.subr.mxu0 %v420
          %464 = vmatpush1.msra.mxu0 %v419
          %465 = vmatprep.subr.mxu0 %v422
          %466 = vmatpush1.msra.mxu0 %v421
          %467 = vmatprep.subr.mxu0 %v424
          %468 = vmatpush1.msra.mxu0 %v423
          %469 = vmatprep.subr.mxu0 %v426
          %470 = vmatpush1.msra.mxu0 %v425
          %471 = vmatprep.subr.mxu0 %v428
          %472 = vmatpush1.msra.mxu0 %v427
          %473 = vmatprep.subr.mxu0 %v430
          %474 = vmatpush1.msra.mxu0 %v429
          %475 = vmatprep.subr.mxu0 %v432
          %476 = vmatpush1.msra.mxu0 %v431
          %477 = vmatprep.subr.mxu0 %v434
          %478 = vmatpush1.msra.mxu0 %v433
          %479 = vmatprep.subr.mxu0 %v436
          %480 = vmatpush1.msra.mxu0 %v435
          %481 = vmatprep.subr.mxu0 %v438
          %482 = vmatpush1.msra.mxu0 %v437
          %483 = vmatprep.subr.mxu0 %v440
          %484 = vmatpush1.msra.mxu0 %v439
          %485 = vmatprep.subr.mxu0 %v442
          %486 = vmatpush1.msra.mxu0 %v441
          %487 = vmatprep.subr.mxu0 %v444
          %488 = vmatpush1.msra.mxu0 %v443
          %489 = vmatprep.subr.mxu0 %v446
          %490 = vmatpush1.msra.mxu0 %v445
          %491 = vmatprep.subr.mxu0 %v448
          %492 = vmatpush1.msra.mxu0 %v447
          %493 = vmatprep.subr.mxu0 0.0
          %494 = vmatpush1.msra.mxu0 0.0
          %495 = vmatprep.subr.mxu0 0.0
          %496 = vmatpush1.msra.mxu0 0.0
          %497 = vmatprep.subr.mxu0 0.0
          %498 = vmatpush1.msra.mxu0 0.0
          %499 = vmatprep.subr.mxu0 0.0
          %500 = vmatpush1.msra.mxu0 0.0
          %501 = vmatprep.subr.mxu0 0.0
          %502 = vmatpush1.msra.mxu0 0.0
          %503 = vmatprep.subr.mxu0 0.0
          %504 = vmatpush1.msra.mxu0 0.0
          %505 = vmatprep.subr.mxu0 0.0
          %506 = vmatpush1.msra.mxu0 0.0
          %507 = vmatprep.subr.mxu0 0.0
          %508 = vmatpush1.msra.mxu0 0.0
          %509 = vmatprep.subr.mxu0 0.0
          %510 = vmatpush1.msra.mxu0 0.0
          %511 = vmatprep.subr.mxu0 0.0
          %512 = vmatpush1.msra.mxu0 0.0
          %513 = vmatprep.subr.mxu0 0.0
          %514 = vmatpush1.msra.mxu0 0.0
          %515 = vmatprep.subr.mxu0 0.0
          %516 = vmatpush1.msra.mxu0 0.0
          %517 = vmatprep.subr.mxu0 0.0
          %518 = vmatpush1.msra.mxu0 0.0
          %519 = vmatprep.subr.mxu0 0.0
          %520 = vmatpush1.msra.mxu0 0.0
          %521 = vmatprep.subr.mxu0 0.0
          %522 = vmatpush1.msra.mxu0 0.0
          %523 = vmatprep.subr.mxu0 0.0
          %524 = vmatpush1.msra.mxu0 0.0
          %525 = vmatprep.mubr.f32.mxu0 0.0
          %526 = vmatmul.mubr.f32.gmra.mrb[0].mxu0 %v401
          %v527 = vpop.f32.mrb[0].mxu0
          %v528 = vadd.f32 %v454, %v527
          %v529 = vpop.f32.mrb[0].mxu0
          %v530 = vadd.f32 %v458, %v529
          %531 = vmatprep.mubr.f32.mxu0 0.0
          %532 = vmatmul.mubr.f32.gmra.mrb[0].mxu0 %v402
          %v533 = vpop.f32.mrb[0].mxu0
          %v534 = vadd.f32 %v454, %v533
          %v535 = vpop.f32.mrb[0].mxu0
          %v536 = vadd.f32 %v458, %v535
          %537 = vmatprep.mubr.f32.mxu0 0.0
          %538 = vmatmul.mubr.f32.gmra.mrb[0].mxu0 %v403
          %v539 = vpop.f32.mrb[0].mxu0
          %v540 = vadd.f32 %v454, %v539
          %v541 = vpop.f32.mrb[0].mxu0
          %v542 = vadd.f32 %v458, %v541
          %543 = vmatprep.mubr.f32.mxu0 0.0
          %544 = vmatmul.mubr.f32.gmra.mrb[0].mxu0 %v404
          %v545 = vpop.f32.mrb[0].mxu0
          %v546 = vadd.f32 %v454, %v545
          %v547 = vpop.f32.mrb[0].mxu0
          %v548 = vadd.f32 %v458, %v547
          %549 = vmatprep.mubr.f32.mxu0 0.0
          %550 = vmatmul.mubr.f32.gmra.mrb[0].mxu0 %v405
          %v551 = vpop.f32.mrb[0].mxu0
          %v552 = vadd.f32 %v454, %v551
          %v553 = vpop.f32.mrb[0].mxu0
          %v554 = vadd.f32 %v458, %v553
          %555 = vmatprep.mubr.f32.mxu0 0.0
          %556 = vmatmul.mubr.f32.gmra.mrb[0].mxu0 %v406
          %v557 = vpop.f32.mrb[0].mxu0
          %v558 = vadd.f32 %v454, %v557
          %v559 = vpop.f32.mrb[0].mxu0
          %v560 = vadd.f32 %v458, %v559
          %561 = vmatprep.mubr.f32.mxu0 0.0
          %562 = vmatmul.mubr.f32.gmra.mrb[0].mxu0 %v407
          %v563 = vpop.f32.mrb[0].mxu0
          %v564 = vadd.f32 %v454, %v563
          %v565 = vpop.f32.mrb[0].mxu0
          %v566 = vadd.f32 %v458, %v565
          %567 = vmatprep.mubr.f32.mxu0 0.0
          %568 = vmatmul.mubr.f32.gmra.mrb[0].mxu0 %v408
          %v569 = vpop.f32.mrb[0].mxu0
          %v570 = vadd.f32 %v454, %v569
          %v571 = vpop.f32.mrb[0].mxu0
          %v572 = vadd.f32 %v458, %v571
          %573 = vmatprep.mubr.f32.mxu0 0.0
          %574 = vmatmul.mubr.f32.gmra.mrb[0].mxu0 %v409
          %v575 = vpop.f32.mrb[0].mxu0
          %v576 = vadd.f32 %v454, %v575
          %v577 = vpop.f32.mrb[0].mxu0
          %v578 = vadd.f32 %v458, %v577
          %579 = vmatprep.mubr.f32.mxu0 0.0
          %580 = vmatmul.mubr.f32.gmra.mrb[0].mxu0 %v410
          %v581 = vpop.f32.mrb[0].mxu0
          %v582 = vadd.f32 %v454, %v581
          %v583 = vpop.f32.mrb[0].mxu0
          %v584 = vadd.f32 %v458, %v583
          %585 = vmatprep.mubr.f32.mxu0 0.0
          %586 = vmatmul.mubr.f32.gmra.mrb[0].mxu0 %v411
          %v587 = vpop.f32.mrb[0].mxu0
          %v588 = vadd.f32 %v454, %v587
          %v589 = vpop.f32.mrb[0].mxu0
          %v590 = vadd.f32 %v458, %v589
          %591 = vmatprep.mubr.f32.mxu0 0.0
          %592 = vmatmul.mubr.f32.gmra.mrb[0].mxu0 %v412
          %v593 = vpop.f32.mrb[0].mxu0
          %v594 = vadd.f32 %v454, %v593
          %v595 = vpop.f32.mrb[0].mxu0
          %v596 = vadd.f32 %v458, %v595
          %597 = vmatprep.mubr.f32.mxu0 0.0
          %598 = vmatmul.mubr.f32.gmra.mrb[0].mxu0 %v413
          %v599 = vpop.f32.mrb[0].mxu0
          %v600 = vadd.f32 %v454, %v599
          %v601 = vpop.f32.mrb[0].mxu0
          %v602 = vadd.f32 %v458, %v601
          %603 = vmatprep.mubr.f32.mxu0 0.0
          %604 = vmatmul.mubr.f32.gmra.mrb[0].mxu0 %v414
          %v605 = vpop.f32.mrb[0].mxu0
          %v606 = vadd.f32 %v454, %v605
          %v607 = vpop.f32.mrb[0].mxu0
          %v608 = vadd.f32 %v458, %v607
          %609 = vmatprep.mubr.f32.mxu0 0.0
          %610 = vmatmul.mubr.f32.gmra.mrb[0].mxu0 %v415
          %v611 = vpop.f32.mrb[0].mxu0
          %v612 = vadd.f32 %v454, %v611
          %v613 = vpop.f32.mrb[0].mxu0
          %v614 = vadd.f32 %v458, %v613
          %615 = vmatprep.mubr.f32.mxu0 0.0
          %616 = vmatmul.mubr.f32.gmra.mrb[0].mxu0 %v416
          %v617 = vpop.f32.mrb[0].mxu0
          %v618 = vadd.f32 %v454, %v617
          %v619 = vpop.f32.mrb[0].mxu0
          %v620 = vadd.f32 %v458, %v619
          %621 = vdwg.mxu0
          %622 = vst [vmem:[#allocation2] sm:$0xff] %v528
          %623 = vst [vmem:[#allocation2 + $0x8] sm:$0xff] %v530
          %624 = vst [vmem:[#allocation2 + $0x10] sm:$0xff] %v534
          %625 = vst [vmem:[#allocation2 + $0x18] sm:$0xff] %v536
          %626 = vst [vmem:[#allocation2 + $0x20] sm:$0xff] %v540
          %627 = vst [vmem:[#allocation2 + $0x28] sm:$0xff] %v542
          %628 = vst [vmem:[#allocation2 + $0x30] sm:$0xff] %v546
          %629 = vst [vmem:[#allocation2 + $0x38] sm:$0xff] %v548
          %630 = vst [vmem:[#allocation2 + $0x40] sm:$0xff] %v552
          %631 = vst [vmem:[#allocation2 + $0x48] sm:$0xff] %v554
          %632 = vst [vmem:[#allocation2 + $0x50] sm:$0xff] %v558
          %633 = vst [vmem:[#allocation2 + $0x58] sm:$0xff] %v560
          %634 = vst [vmem:[#allocation2 + $0x60] sm:$0xff] %v564
          %635 = vst [vmem:[#allocation2 + $0x68] sm:$0xff] %v566
          %636 = vst [vmem:[#allocation2 + $0x70] sm:$0xff] %v570
          %637 = vst [vmem:[#allocation2 + $0x78] sm:$0xff] %v572
          %638 = vst [vmem:[#allocation2 + $0x80] sm:$0xff] %v576
          %639 = vst [vmem:[#allocation2 + $0x88] sm:$0xff] %v578
          %640 = vst [vmem:[#allocation2 + $0x90] sm:$0xff] %v582
          %641 = vst [vmem:[#allocation2 + $0x98] sm:$0xff] %v584
          %642 = vst [vmem:[#allocation2 + $0xa0] sm:$0xff] %v588
          %643 = vst [vmem:[#allocation2 + $0xa8] sm:$0xff] %v590
          %644 = vst [vmem:[#allocation2 + $0xb0] sm:$0xff] %v594
          %645 = vst [vmem:[#allocation2 + $0xb8] sm:$0xff] %v596
          %646 = vst [vmem:[#allocation2 + $0xc0] sm:$0xff] %v600
          %647 = vst [vmem:[#allocation2 + $0xc8] sm:$0xff] %v602
          %648 = vst [vmem:[#allocation2 + $0xd0] sm:$0xff] %v606
          %649 = vst [vmem:[#allocation2 + $0xd8] sm:$0xff] %v608
          %650 = vst [vmem:[#allocation2 + $0xe0] sm:$0xff] %v612
          %651 = vst [vmem:[#allocation2 + $0xe8] sm:$0xff] %v614
          %652 = vst [vmem:[#allocation2 + $0xf0] sm:$0xff] %v618
          %653 = vst [vmem:[#allocation2 + $0xf8] sm:$0xff] %v620
        $region76: #{tpu_custom_call.1} parent=51 // pred_fallthru
          _
        %s654 = smul.u32 %s32, 64
        %s655 = scalar_lea.vmem %s347, %s654 [#allocation3]
        %v656 = vld [vmem:[%s655] sm:$0xff]
        %v657 = vld [vmem:[%s655 + $0x8] sm:$0xff]
        %v658 = vld [vmem:[%s655 + $0x10] sm:$0xff]
        %v659 = vld [vmem:[%s655 + $0x18] sm:$0xff]
        %v660 = vld [vmem:[%s655 + $0x20] sm:$0xff]
        %v661 = vld [vmem:[%s655 + $0x28] sm:$0xff]
        %v662 = vld [vmem:[%s655 + $0x30] sm:$0xff]
        %v663 = vld [vmem:[%s655 + $0x38] sm:$0xff]
        %v664 = vld [vmem:[#allocation6] sm:$0xff]
        %v665 = vld [vmem:[#allocation6 + $0x18] sm:$0xff]
        %v666 = vld [vmem:[#allocation6 + $0x30] sm:$0xff]
        %v667 = vld [vmem:[#allocation6 + $0x48] sm:$0xff]
        %v668 = vld [vmem:[#allocation6 + $0x60] sm:$0xff]
        %v669 = vld [vmem:[#allocation6 + $0x78] sm:$0xff]
        %v670 = vld [vmem:[#allocation6 + $0x90] sm:$0xff]
        %v671 = vld [vmem:[#allocation6 + $0xa8] sm:$0xff]
        %v672 = vld [vmem:[#allocation6 + $0xc0] sm:$0xff]
        %v673 = vld [vmem:[#allocation6 + $0xd8] sm:$0xff]
        %v674 = vld [vmem:[#allocation6 + $0xf0] sm:$0xff]
        %v675 = vld [vmem:[#allocation6 + $0x108] sm:$0xff]
        %v676 = vld [vmem:[#allocation6 + $0x120] sm:$0xff]
        %v677 = vld [vmem:[#allocation6 + $0x138] sm:$0xff]
        %v678 = vld [vmem:[#allocation6 + $0x150] sm:$0xff]
        %v679 = vld [vmem:[#allocation6 + $0x168] sm:$0xff]
        %v680 = vld [vmem:[%s2] sm:$0x1]
        %v682 = vlaneseq
        %v683 = vshrl.u32 %v682, 7
        %v684 = vsub.s32 0, %v683
        %v685 = vrot.slane %v680, %v684
        %687 = vmatprep.subr.mxu0 0.0
        %688 = vmatpush1.msra.mxu0 %v664
        %689 = vmatprep.subr.mxu0 0.0
        %690 = vmatpush1.msra.mxu0 %v665
        %691 = vmatprep.subr.mxu0 0.0
        %692 = vmatpush1.msra.mxu0 %v666
        %693 = vmatprep.subr.mxu0 0.0
        %694 = vmatpush1.msra.mxu0 %v667
        %695 = vmatprep.subr.mxu0 0.0
        %696 = vmatpush1.msra.mxu0 %v668
        %697 = vmatprep.subr.mxu0 0.0
        %698 = vmatpush1.msra.mxu0 %v669
        %699 = vmatprep.subr.mxu0 0.0
        %700 = vmatpush1.msra.mxu0 %v670
        %701 = vmatprep.subr.mxu0 0.0
        %702 = vmatpush1.msra.mxu0 %v671
        %703 = vmatprep.subr.mxu0 0.0
        %704 = vmatpush1.msra.mxu0 %v672
        %705 = vmatprep.subr.mxu0 0.0
        %706 = vmatpush1.msra.mxu0 %v673
        %707 = vmatprep.subr.mxu0 0.0
        %708 = vmatpush1.msra.mxu0 %v674
        %709 = vmatprep.subr.mxu0 0.0
        %710 = vmatpush1.msra.mxu0 %v675
        %711 = vmatprep.subr.mxu0 0.0
        %712 = vmatpush1.msra.mxu0 %v676
        %713 = vmatprep.subr.mxu0 0.0
        %714 = vmatpush1.msra.mxu0 %v677
        %715 = vmatprep.subr.mxu0 0.0
        %716 = vmatpush1.msra.mxu0 %v678
        %717 = vmatprep.subr.mxu0 0.0
        %718 = vmatpush1.msra.mxu0 %v679
        %719 = vmatprep.subr.mxu0 0.0
        %720 = vmatpush1.msra.mxu0 0.0
        %721 = vmatprep.subr.mxu0 0.0
        %722 = vmatpush1.msra.mxu0 0.0
        %723 = vmatprep.subr.mxu0 0.0
        %724 = vmatpush1.msra.mxu0 0.0
        %725 = vmatprep.subr.mxu0 0.0
        %726 = vmatpush1.msra.mxu0 0.0
        %727 = vmatprep.subr.mxu0 0.0
        %728 = vmatpush1.msra.mxu0 0.0
        %729 = vmatprep.subr.mxu0 0.0
        %730 = vmatpush1.msra.mxu0 0.0
        %731 = vmatprep.subr.mxu0 0.0
        %732 = vmatpush1.msra.mxu0 0.0
        %733 = vmatprep.subr.mxu0 0.0
        %734 = vmatpush1.msra.mxu0 0.0
        %735 = vmatprep.subr.mxu0 0.0
        %736 = vmatpush1.msra.mxu0 0.0
        %737 = vmatprep.subr.mxu0 0.0
        %738 = vmatpush1.msra.mxu0 0.0
        %739 = vmatprep.subr.mxu0 0.0
        %740 = vmatpush1.msra.mxu0 0.0
        %741 = vmatprep.subr.mxu0 0.0
        %742 = vmatpush1.msra.mxu0 0.0
        %743 = vmatprep.subr.mxu0 0.0
        %744 = vmatpush1.msra.mxu0 0.0
        %745 = vmatprep.subr.mxu0 0.0
        %746 = vmatpush1.msra.mxu0 0.0
        %747 = vmatprep.subr.mxu0 0.0
        %748 = vmatpush1.msra.mxu0 0.0
        %749 = vmatprep.subr.mxu0 0.0
        %750 = vmatpush1.msra.mxu0 0.0
        %751 = vmatprep.mubr.f32.mxu0 0.0
        %752 = vmatmul.mubr.f32.gmra.mrb[0].mxu0 %v656
        %v753 = vpop.f32.mrb[0].mxu0
        %v754 = vadd.f32 %v685, %v753
        %v755 = vpop.f32.mrb[0].mxu0
        %756 = vmatprep.mubr.f32.mxu0 0.0
        %757 = vmatmul.mubr.f32.gmra.mrb[0].mxu0 %v657
        %v758 = vpop.f32.mrb[0].mxu0
        %v759 = vadd.f32 %v685, %v758
        %v760 = vpop.f32.mrb[0].mxu0
        %761 = vmatprep.mubr.f32.mxu0 0.0
        %762 = vmatmul.mubr.f32.gmra.mrb[0].mxu0 %v658
        %v763 = vpop.f32.mrb[0].mxu0
        %v764 = vadd.f32 %v685, %v763
        %v765 = vpop.f32.mrb[0].mxu0
        %766 = vmatprep.mubr.f32.mxu0 0.0
        %767 = vmatmul.mubr.f32.gmra.mrb[0].mxu0 %v659
        %v768 = vpop.f32.mrb[0].mxu0
        %v769 = vadd.f32 %v685, %v768
        %v770 = vpop.f32.mrb[0].mxu0
        %771 = vmatprep.mubr.f32.mxu0 0.0
        %772 = vmatmul.mubr.f32.gmra.mrb[0].mxu0 %v660
        %v773 = vpop.f32.mrb[0].mxu0
        %v774 = vadd.f32 %v685, %v773
        %v775 = vpop.f32.mrb[0].mxu0
        %776 = vmatprep.mubr.f32.mxu0 0.0
        %777 = vmatmul.mubr.f32.gmra.mrb[0].mxu0 %v661
        %v778 = vpop.f32.mrb[0].mxu0
        %v779 = vadd.f32 %v685, %v778
        %v780 = vpop.f32.mrb[0].mxu0
        %781 = vmatprep.mubr.f32.mxu0 0.0
        %782 = vmatmul.mubr.f32.gmra.mrb[0].mxu0 %v662
        %v783 = vpop.f32.mrb[0].mxu0
        %v784 = vadd.f32 %v685, %v783
        %v785 = vpop.f32.mrb[0].mxu0
        %786 = vmatprep.mubr.f32.mxu0 0.0
        %787 = vmatmul.mubr.f32.gmra.mrb[0].mxu0 %v663
        %v788 = vpop.f32.mrb[0].mxu0
        %v789 = vadd.f32 %v685, %v788
        %v790 = vpop.f32.mrb[0].mxu0
        %791 = vdwg.mxu0
        %v792 = vmul.f32 %v754, 0.088388346
        %v793 = vmul.f32 %v759, 0.088388346
        %v794 = vmul.f32 %v764, 0.088388346
        %v795 = vmul.f32 %v769, 0.088388346
        %v796 = vmul.f32 %v774, 0.088388346
        %v797 = vmul.f32 %v779, 0.088388346
        %v798 = vmul.f32 %v784, 0.088388346
        %v799 = vmul.f32 %v789, 0.088388346
        %v800 = vld [vmem:[#allocation2] sm:$0xff]
        %v801 = vld [vmem:[#allocation2 + $0x10] sm:$0xff]
        %v802 = vld [vmem:[#allocation2 + $0x20] sm:$0xff]
        %v803 = vld [vmem:[#allocation2 + $0x30] sm:$0xff]
        %v804 = vld [vmem:[#allocation2 + $0x40] sm:$0xff]
        %v805 = vld [vmem:[#allocation2 + $0x50] sm:$0xff]
        %v806 = vld [vmem:[#allocation2 + $0x60] sm:$0xff]
        %v807 = vld [vmem:[#allocation2 + $0x70] sm:$0xff]
        %v808 = vld [vmem:[#allocation2 + $0x80] sm:$0xff]
        %v809 = vld [vmem:[#allocation2 + $0x90] sm:$0xff]
        %v810 = vld [vmem:[#allocation2 + $0xa0] sm:$0xff]
        %v811 = vld [vmem:[#allocation2 + $0xb0] sm:$0xff]
        %v812 = vld [vmem:[#allocation2 + $0xc0] sm:$0xff]
        %v813 = vld [vmem:[#allocation2 + $0xd0] sm:$0xff]
        %v814 = vld [vmem:[#allocation2 + $0xe0] sm:$0xff]
        %v815 = vld [vmem:[#allocation2 + $0xf0] sm:$0xff]
        %v816 = vld [vmem:[#allocation2 + $0x8] sm:$0xff]
        %v817 = vld [vmem:[#allocation2 + $0x18] sm:$0xff]
        %v818 = vld [vmem:[#allocation2 + $0x28] sm:$0xff]
        %v819 = vld [vmem:[#allocation2 + $0x38] sm:$0xff]
        %v820 = vld [vmem:[#allocation2 + $0x48] sm:$0xff]
        %v821 = vld [vmem:[#allocation2 + $0x58] sm:$0xff]
        %v822 = vld [vmem:[#allocation2 + $0x68] sm:$0xff]
        %v823 = vld [vmem:[#allocation2 + $0x78] sm:$0xff]
        %v824 = vld [vmem:[#allocation2 + $0x88] sm:$0xff]
        %v825 = vld [vmem:[#allocation2 + $0x98] sm:$0xff]
        %v826 = vld [vmem:[#allocation2 + $0xa8] sm:$0xff]
        %v827 = vld [vmem:[#allocation2 + $0xb8] sm:$0xff]
        %v828 = vld [vmem:[#allocation2 + $0xc8] sm:$0xff]
        %v829 = vld [vmem:[#allocation2 + $0xd8] sm:$0xff]
        %v830 = vld [vmem:[#allocation2 + $0xe8] sm:$0xff]
        %v831 = vld [vmem:[#allocation2 + $0xf8] sm:$0xff]
        %832 = vmatprep.subr.mxu0 0.0
        %833 = vmatpush1.xpose.msra.mxu0 %v800
        %834 = vmatprep.subr.mxu0 0.0
        %835 = vmatpush1.xpose.msra.mxu0 %v801
        %836 = vmatprep.subr.mxu0 0.0
        %837 = vmatpush1.xpose.msra.mxu0 %v802
        %838 = vmatprep.subr.mxu0 0.0
        %839 = vmatpush1.xpose.msra.mxu0 %v803
        %840 = vmatprep.subr.mxu0 0.0
        %841 = vmatpush1.xpose.msra.mxu0 %v804
        %842 = vmatprep.subr.mxu0 0.0
        %843 = vmatpush1.xpose.msra.mxu0 %v805
        %844 = vmatprep.subr.mxu0 0.0
        %845 = vmatpush1.xpose.msra.mxu0 %v806
        %846 = vmatprep.subr.mxu0 0.0
        %847 = vmatpush1.xpose.msra.mxu0 %v807
        %848 = vmatprep.subr.mxu0 0.0
        %849 = vmatpush1.xpose.msra.mxu0 %v808
        %850 = vmatprep.subr.mxu0 0.0
        %851 = vmatpush1.xpose.msra.mxu0 %v809
        %852 = vmatprep.subr.mxu0 0.0
        %853 = vmatpush1.xpose.msra.mxu0 %v810
        %854 = vmatprep.subr.mxu0 0.0
        %855 = vmatpush1.xpose.msra.mxu0 %v811
        %856 = vmatprep.subr.mxu0 0.0
        %857 = vmatpush1.xpose.msra.mxu0 %v812
        %858 = vmatprep.subr.mxu0 0.0
        %859 = vmatpush1.xpose.msra.mxu0 %v813
        %860 = vmatprep.subr.mxu0 0.0
        %861 = vmatpush1.xpose.msra.mxu0 %v814
        %862 = vmatprep.subr.mxu0 0.0
        %863 = vmatpush1.xpose.msra.mxu0 %v815
        %864 = vmatprep.subr.mxu0 0.0
        %865 = vmatpush1.xpose.msra.mxu0 0.0
        %866 = vmatprep.subr.mxu0 0.0
        %867 = vmatpush1.xpose.msra.mxu0 0.0
        %868 = vmatprep.subr.mxu0 0.0
        %869 = vmatpush1.xpose.msra.mxu0 0.0
        %870 = vmatprep.subr.mxu0 0.0
        %871 = vmatpush1.xpose.msra.mxu0 0.0
        %872 = vmatprep.subr.mxu0 0.0
        %873 = vmatpush1.xpose.msra.mxu0 0.0
        %874 = vmatprep.subr.mxu0 0.0
        %875 = vmatpush1.xpose.msra.mxu0 0.0
        %876 = vmatprep.subr.mxu0 0.0
        %877 = vmatpush1.xpose.msra.mxu0 0.0
        %878 = vmatprep.subr.mxu0 0.0
        %879 = vmatpush1.xpose.msra.mxu0 0.0
        %880 = vmatprep.subr.mxu0 0.0
        %881 = vmatpush1.xpose.msra.mxu0 0.0
        %882 = vmatprep.subr.mxu0 0.0
        %883 = vmatpush1.xpose.msra.mxu0 0.0
        %884 = vmatprep.subr.mxu0 0.0
        %885 = vmatpush1.xpose.msra.mxu0 0.0
        %886 = vmatprep.subr.mxu0 0.0
        %887 = vmatpush1.xpose.msra.mxu0 0.0
        %888 = vmatprep.subr.mxu0 0.0
        %889 = vmatpush1.xpose.msra.mxu0 0.0
        %890 = vmatprep.subr.mxu0 0.0
        %891 = vmatpush1.xpose.msra.mxu0 0.0
        %892 = vmatprep.subr.mxu0 0.0
        %893 = vmatpush1.xpose.msra.mxu0 0.0
        %894 = vmatprep.subr.mxu0 0.0
        %895 = vmatpush1.xpose.msra.mxu0 0.0
        %896 = vmatprep.mubr.f32.mxu0 0.0
        %897 = vmatmul.mubr.f32.gmra.mrb[0].mxu0 %v792
        %v898 = vpop.f32.mrb[0].mxu0
        %v899 = vadd.f32 0.0, %v898
        %v900 = vpop.f32.mrb[0].mxu0
        %901 = vmatprep.mubr.f32.mxu0 0.0
        %902 = vmatmul.mubr.f32.gmra.mrb[0].mxu0 %v793
        %v903 = vpop.f32.mrb[0].mxu0
        %v904 = vadd.f32 0.0, %v903
        %v905 = vpop.f32.mrb[0].mxu0
        %906 = vmatprep.mubr.f32.mxu0 0.0
        %907 = vmatmul.mubr.f32.gmra.mrb[0].mxu0 %v794
        %v908 = vpop.f32.mrb[0].mxu0
        %v909 = vadd.f32 0.0, %v908
        %v910 = vpop.f32.mrb[0].mxu0
        %911 = vmatprep.mubr.f32.mxu0 0.0
        %912 = vmatmul.mubr.f32.gmra.mrb[0].mxu0 %v795
        %v913 = vpop.f32.mrb[0].mxu0
        %v914 = vadd.f32 0.0, %v913
        %v915 = vpop.f32.mrb[0].mxu0
        %916 = vmatprep.mubr.f32.mxu0 0.0
        %917 = vmatmul.mubr.f32.gmra.mrb[0].mxu0 %v796
        %v918 = vpop.f32.mrb[0].mxu0
        %v919 = vadd.f32 0.0, %v918
        %v920 = vpop.f32.mrb[0].mxu0
        %921 = vmatprep.mubr.f32.mxu0 0.0
        %922 = vmatmul.mubr.f32.gmra.mrb[0].mxu0 %v797
        %v923 = vpop.f32.mrb[0].mxu0
        %v924 = vadd.f32 0.0, %v923
        %v925 = vpop.f32.mrb[0].mxu0
        %926 = vmatprep.mubr.f32.mxu0 0.0
        %927 = vmatmul.mubr.f32.gmra.mrb[0].mxu0 %v798
        %v928 = vpop.f32.mrb[0].mxu0
        %v929 = vadd.f32 0.0, %v928
        %v930 = vpop.f32.mrb[0].mxu0
        %931 = vmatprep.mubr.f32.mxu0 0.0
        %932 = vmatmul.mubr.f32.gmra.mrb[0].mxu0 %v799
        %v933 = vpop.f32.mrb[0].mxu0
        %v934 = vadd.f32 0.0, %v933
        %v935 = vpop.f32.mrb[0].mxu0
        %936 = vdwg.mxu0
        %937 = vmax.xlane.f32.xlu0 %v899
        %v938 = vpop.xlane.xlu0 %937
        %939 = vmax.xlane.f32.xlu0 %v904
        %v940 = vpop.xlane.xlu0 %939
        %941 = vmax.xlane.f32.xlu0 %v909
        %v942 = vpop.xlane.xlu0 %941
        %943 = vmax.xlane.f32.xlu0 %v914
        %v944 = vpop.xlane.xlu0 %943
        %945 = vmax.xlane.f32.xlu0 %v919
        %v946 = vpop.xlane.xlu0 %945
        %947 = vmax.xlane.f32.xlu0 %v924
        %v948 = vpop.xlane.xlu0 %947
        %949 = vmax.xlane.f32.xlu0 %v929
        %v950 = vpop.xlane.xlu0 %949
        %951 = vmax.xlane.f32.xlu0 %v934
        %v952 = vpop.xlane.xlu0 %951
        %v953 = vsub.f32 %v899, %v938
        %v954 = vsub.f32 %v904, %v940
        %v955 = vsub.f32 %v909, %v942
        %v956 = vsub.f32 %v914, %v944
        %v957 = vsub.f32 %v919, %v946
        %v958 = vsub.f32 %v924, %v948
        %v959 = vsub.f32 %v929, %v950
        %v960 = vsub.f32 %v934, %v952
        %v961 = vmul.f32 %v953, 1.442695
        %v962 = vpow.pop %v961
        %v963 = vmul.f32 %v954, 1.442695
        %v964 = vpow.pop %v963
        %v965 = vmul.f32 %v955, 1.442695
        %v966 = vpow.pop %v965
        %v967 = vmul.f32 %v956, 1.442695
        %v968 = vpow.pop %v967
        %v969 = vmul.f32 %v957, 1.442695
        %v970 = vpow.pop %v969
        %v971 = vmul.f32 %v958, 1.442695
        %v972 = vpow.pop %v971
        %v973 = vmul.f32 %v959, 1.442695
        %v974 = vpow.pop %v973
        %v975 = vmul.f32 %v960, 1.442695
        %v976 = vpow.pop %v975
        %977 = vadd.xlane.f32.xlu0 %v962
        %v978 = vpop.xlane.xlu0 %977
        %979 = vadd.xlane.f32.xlu0 %v964
        %v980 = vpop.xlane.xlu0 %979
        %981 = vadd.xlane.f32.xlu0 %v966
        %v982 = vpop.xlane.xlu0 %981
        %983 = vadd.xlane.f32.xlu0 %v968
        %v984 = vpop.xlane.xlu0 %983
        %985 = vadd.xlane.f32.xlu0 %v970
        %v986 = vpop.xlane.xlu0 %985
        %987 = vadd.xlane.f32.xlu0 %v972
        %v988 = vpop.xlane.xlu0 %987
        %989 = vadd.xlane.f32.xlu0 %v974
        %v990 = vpop.xlane.xlu0 %989
        %991 = vadd.xlane.f32.xlu0 %v976
        %v992 = vpop.xlane.xlu0 %991
        %v993 = vrcp.pop %v978
        %v994 = vrcp.pop %v980
        %v995 = vrcp.pop %v982
        %v996 = vrcp.pop %v984
        %v997 = vrcp.pop %v986
        %v998 = vrcp.pop %v988
        %v999 = vrcp.pop %v990
        %v1000 = vrcp.pop %v992
        %v1001 = vmul.f32 %v962, %v993
        %v1002 = vmul.f32 %v964, %v994
        %v1003 = vmul.f32 %v966, %v995
        %v1004 = vmul.f32 %v968, %v996
        %v1005 = vmul.f32 %v970, %v997
        %v1006 = vmul.f32 %v972, %v998
        %v1007 = vmul.f32 %v974, %v999
        %v1008 = vmul.f32 %v976, %v1000
        %1009 = vmatprep.subr.mxu0 0.0
        %1010 = vmatpush1.msra.mxu0 %v816
        %1011 = vmatprep.subr.mxu0 0.0
        %1012 = vmatpush1.msra.mxu0 %v817
        %1013 = vmatprep.subr.mxu0 0.0
        %1014 = vmatpush1.msra.mxu0 %v818
        %1015 = vmatprep.subr.mxu0 0.0
        %1016 = vmatpush1.msra.mxu0 %v819
        %1017 = vmatprep.subr.mxu0 0.0
        %1018 = vmatpush1.msra.mxu0 %v820
        %1019 = vmatprep.subr.mxu0 0.0
        %1020 = vmatpush1.msra.mxu0 %v821
        %1021 = vmatprep.subr.mxu0 0.0
        %1022 = vmatpush1.msra.mxu0 %v822
        %1023 = vmatprep.subr.mxu0 0.0
        %1024 = vmatpush1.msra.mxu0 %v823
        %1025 = vmatprep.subr.mxu0 0.0
        %1026 = vmatpush1.msra.mxu0 %v824
        %1027 = vmatprep.subr.mxu0 0.0
        %1028 = vmatpush1.msra.mxu0 %v825
        %1029 = vmatprep.subr.mxu0 0.0
        %1030 = vmatpush1.msra.mxu0 %v826
        %1031 = vmatprep.subr.mxu0 0.0
        %1032 = vmatpush1.msra.mxu0 %v827
        %1033 = vmatprep.subr.mxu0 0.0
        %1034 = vmatpush1.msra.mxu0 %v828
        %1035 = vmatprep.subr.mxu0 0.0
        %1036 = vmatpush1.msra.mxu0 %v829
        %1037 = vmatprep.subr.mxu0 0.0
        %1038 = vmatpush1.msra.mxu0 %v830
        %1039 = vmatprep.subr.mxu0 0.0
        %1040 = vmatpush1.msra.mxu0 %v831
        %1041 = vmatprep.subr.mxu0 0.0
        %1042 = vmatpush1.msra.mxu0 0.0
        %1043 = vmatprep.subr.mxu0 0.0
        %1044 = vmatpush1.msra.mxu0 0.0
        %1045 = vmatprep.subr.mxu0 0.0
        %1046 = vmatpush1.msra.mxu0 0.0
        %1047 = vmatprep.subr.mxu0 0.0
        %1048 = vmatpush1.msra.mxu0 0.0
        %1049 = vmatprep.subr.mxu0 0.0
        %1050 = vmatpush1.msra.mxu0 0.0
        %1051 = vmatprep.subr.mxu0 0.0
        %1052 = vmatpush1.msra.mxu0 0.0
        %1053 = vmatprep.subr.mxu0 0.0
        %1054 = vmatpush1.msra.mxu0 0.0
        %1055 = vmatprep.subr.mxu0 0.0
        %1056 = vmatpush1.msra.mxu0 0.0
        %1057 = vmatprep.subr.mxu0 0.0
        %1058 = vmatpush1.msra.mxu0 0.0
        %1059 = vmatprep.subr.mxu0 0.0
        %1060 = vmatpush1.msra.mxu0 0.0
        %1061 = vmatprep.subr.mxu0 0.0
        %1062 = vmatpush1.msra.mxu0 0.0
        %1063 = vmatprep.subr.mxu0 0.0
        %1064 = vmatpush1.msra.mxu0 0.0
        %1065 = vmatprep.subr.mxu0 0.0
        %1066 = vmatpush1.msra.mxu0 0.0
        %1067 = vmatprep.subr.mxu0 0.0
        %1068 = vmatpush1.msra.mxu0 0.0
        %1069 = vmatprep.subr.mxu0 0.0
        %1070 = vmatpush1.msra.mxu0 0.0
        %1071 = vmatprep.subr.mxu0 0.0
        %1072 = vmatpush1.msra.mxu0 0.0
        %1073 = vmatprep.mubr.f32.mxu0 0.0
        %1074 = vmatmul.mubr.f32.gmra.mrb[0].mxu0 %v1001
        %v1075 = vpop.f32.mrb[0].mxu0
        %v1076 = vadd.f32 0.0, %v1075
        %v1077 = vpop.f32.mrb[0].mxu0
        %1078 = vmatprep.mubr.f32.mxu0 0.0
        %1079 = vmatmul.mubr.f32.gmra.mrb[0].mxu0 %v1002
        %v1080 = vpop.f32.mrb[0].mxu0
        %v1081 = vadd.f32 0.0, %v1080
        %v1082 = vpop.f32.mrb[0].mxu0
        %1083 = vmatprep.mubr.f32.mxu0 0.0
        %1084 = vmatmul.mubr.f32.gmra.mrb[0].mxu0 %v1003
        %v1085 = vpop.f32.mrb[0].mxu0
        %v1086 = vadd.f32 0.0, %v1085
        %v1087 = vpop.f32.mrb[0].mxu0
        %1088 = vmatprep.mubr.f32.mxu0 0.0
        %1089 = vmatmul.mubr.f32.gmra.mrb[0].mxu0 %v1004
        %v1090 = vpop.f32.mrb[0].mxu0
        %v1091 = vadd.f32 0.0, %v1090
        %v1092 = vpop.f32.mrb[0].mxu0
        %1093 = vmatprep.mubr.f32.mxu0 0.0
        %1094 = vmatmul.mubr.f32.gmra.mrb[0].mxu0 %v1005
        %v1095 = vpop.f32.mrb[0].mxu0
        %v1096 = vadd.f32 0.0, %v1095
        %v1097 = vpop.f32.mrb[0].mxu0
        %1098 = vmatprep.mubr.f32.mxu0 0.0
        %1099 = vmatmul.mubr.f32.gmra.mrb[0].mxu0 %v1006
        %v1100 = vpop.f32.mrb[0].mxu0
        %v1101 = vadd.f32 0.0, %v1100
        %v1102 = vpop.f32.mrb[0].mxu0
        %1103 = vmatprep.mubr.f32.mxu0 0.0
        %1104 = vmatmul.mubr.f32.gmra.mrb[0].mxu0 %v1007
        %v1105 = vpop.f32.mrb[0].mxu0
        %v1106 = vadd.f32 0.0, %v1105
        %v1107 = vpop.f32.mrb[0].mxu0
        %1108 = vmatprep.mubr.f32.mxu0 0.0
        %1109 = vmatmul.mubr.f32.gmra.mrb[0].mxu0 %v1008
        %v1110 = vpop.f32.mrb[0].mxu0
        %v1111 = vadd.f32 0.0, %v1110
        %v1112 = vpop.f32.mrb[0].mxu0
        %1113 = vdwg.mxu0
        %v1114 = vld [vmem:[#allocation8] sm:$0xff]
        %v1115 = vld [vmem:[#allocation8 + $0x8] sm:$0xff]
        %v1116 = vld [vmem:[#allocation8 + $0x10] sm:$0xff]
        %v1117 = vld [vmem:[#allocation8 + $0x18] sm:$0xff]
        %v1118 = vld [vmem:[#allocation8 + $0x20] sm:$0xff]
        %v1119 = vld [vmem:[#allocation8 + $0x28] sm:$0xff]
        %v1120 = vld [vmem:[#allocation8 + $0x30] sm:$0xff]
        %v1121 = vld [vmem:[#allocation8 + $0x38] sm:$0xff]
        %v1122 = vld [vmem:[#allocation8 + $0x40] sm:$0xff]
        %v1123 = vld [vmem:[#allocation8 + $0x48] sm:$0xff]
        %v1124 = vld [vmem:[#allocation8 + $0x50] sm:$0xff]
        %v1125 = vld [vmem:[#allocation8 + $0x58] sm:$0xff]
        %v1126 = vld [vmem:[#allocation8 + $0x60] sm:$0xff]
        %v1127 = vld [vmem:[#allocation8 + $0x68] sm:$0xff]
        %v1128 = vld [vmem:[#allocation8 + $0x70] sm:$0xff]
        %v1129 = vld [vmem:[#allocation8 + $0x78] sm:$0xff]
        %v1130 = vld [vmem:[%s4] sm:$0x1]
        %v1131 = vlaneseq
        %v1132 = vshrl.u32 %v1131, 7
        %v1133 = vsub.s32 0, %v1132
        %v1134 = vrot.slane %v1130, %v1133
        %1135 = vmatprep.subr.mxu0 0.0
        %1136 = vmatpush1.msra.mxu0 %v1114
        %1137 = vmatprep.subr.mxu0 0.0
        %1138 = vmatpush1.msra.mxu0 %v1115
        %1139 = vmatprep.subr.mxu0 0.0
        %1140 = vmatpush1.msra.mxu0 %v1116
        %1141 = vmatprep.subr.mxu0 0.0
        %1142 = vmatpush1.msra.mxu0 %v1117
        %1143 = vmatprep.subr.mxu0 0.0
        %1144 = vmatpush1.msra.mxu0 %v1118
        %1145 = vmatprep.subr.mxu0 0.0
        %1146 = vmatpush1.msra.mxu0 %v1119
        %1147 = vmatprep.subr.mxu0 0.0
        %1148 = vmatpush1.msra.mxu0 %v1120
        %1149 = vmatprep.subr.mxu0 0.0
        %1150 = vmatpush1.msra.mxu0 %v1121
        %1151 = vmatprep.subr.mxu0 0.0
        %1152 = vmatpush1.msra.mxu0 %v1122
        %1153 = vmatprep.subr.mxu0 0.0
        %1154 = vmatpush1.msra.mxu0 %v1123
        %1155 = vmatprep.subr.mxu0 0.0
        %1156 = vmatpush1.msra.mxu0 %v1124
        %1157 = vmatprep.subr.mxu0 0.0
        %1158 = vmatpush1.msra.mxu0 %v1125
        %1159 = vmatprep.subr.mxu0 0.0
        %1160 = vmatpush1.msra.mxu0 %v1126
        %1161 = vmatprep.subr.mxu0 0.0
        %1162 = vmatpush1.msra.mxu0 %v1127
        %1163 = vmatprep.subr.mxu0 0.0
        %1164 = vmatpush1.msra.mxu0 %v1128
        %1165 = vmatprep.subr.mxu0 0.0
        %1166 = vmatpush1.msra.mxu0 %v1129
        %1167 = vmatprep.subr.mxu0 0.0
        %1168 = vmatpush1.msra.mxu0 0.0
        %1169 = vmatprep.subr.mxu0 0.0
        %1170 = vmatpush1.msra.mxu0 0.0
        %1171 = vmatprep.subr.mxu0 0.0
        %1172 = vmatpush1.msra.mxu0 0.0
        %1173 = vmatprep.subr.mxu0 0.0
        %1174 = vmatpush1.msra.mxu0 0.0
        %1175 = vmatprep.subr.mxu0 0.0
        %1176 = vmatpush1.msra.mxu0 0.0
        %1177 = vmatprep.subr.mxu0 0.0
        %1178 = vmatpush1.msra.mxu0 0.0
        %1179 = vmatprep.subr.mxu0 0.0
        %1180 = vmatpush1.msra.mxu0 0.0
        %1181 = vmatprep.subr.mxu0 0.0
        %1182 = vmatpush1.msra.mxu0 0.0
        %1183 = vmatprep.subr.mxu0 0.0
        %1184 = vmatpush1.msra.mxu0 0.0
        %1185 = vmatprep.subr.mxu0 0.0
        %1186 = vmatpush1.msra.mxu0 0.0
        %1187 = vmatprep.subr.mxu0 0.0
        %1188 = vmatpush1.msra.mxu0 0.0
        %1189 = vmatprep.subr.mxu0 0.0
        %1190 = vmatpush1.msra.mxu0 0.0
        %1191 = vmatprep.subr.mxu0 0.0
        %1192 = vmatpush1.msra.mxu0 0.0
        %1193 = vmatprep.subr.mxu0 0.0
        %1194 = vmatpush1.msra.mxu0 0.0
        %1195 = vmatprep.subr.mxu0 0.0
        %1196 = vmatpush1.msra.mxu0 0.0
        %1197 = vmatprep.subr.mxu0 0.0
        %1198 = vmatpush1.msra.mxu0 0.0
        %1199 = vmatprep.mubr.f32.mxu0 0.0
        %1200 = vmatmul.mubr.f32.gmra.mrb[0].mxu0 %v1076
        %v1201 = vpop.f32.mrb[0].mxu0
        %v1202 = vadd.f32 %v1134, %v1201
        %v1203 = vpop.f32.mrb[0].mxu0
        %1204 = vmatprep.mubr.f32.mxu0 0.0
        %1205 = vmatmul.mubr.f32.gmra.mrb[0].mxu0 %v1081
        %v1206 = vpop.f32.mrb[0].mxu0
        %v1207 = vadd.f32 %v1134, %v1206
        %v1208 = vpop.f32.mrb[0].mxu0
        %1209 = vmatprep.mubr.f32.mxu0 0.0
        %1210 = vmatmul.mubr.f32.gmra.mrb[0].mxu0 %v1086
        %v1211 = vpop.f32.mrb[0].mxu0
        %v1212 = vadd.f32 %v1134, %v1211
        %v1213 = vpop.f32.mrb[0].mxu0
        %1214 = vmatprep.mubr.f32.mxu0 0.0
        %1215 = vmatmul.mubr.f32.gmra.mrb[0].mxu0 %v1091
        %v1216 = vpop.f32.mrb[0].mxu0
        %v1217 = vadd.f32 %v1134, %v1216
        %v1218 = vpop.f32.mrb[0].mxu0
        %1219 = vmatprep.mubr.f32.mxu0 0.0
        %1220 = vmatmul.mubr.f32.gmra.mrb[0].mxu0 %v1096
        %v1221 = vpop.f32.mrb[0].mxu0
        %v1222 = vadd.f32 %v1134, %v1221
        %v1223 = vpop.f32.mrb[0].mxu0
        %1224 = vmatprep.mubr.f32.mxu0 0.0
        %1225 = vmatmul.mubr.f32.gmra.mrb[0].mxu0 %v1101
        %v1226 = vpop.f32.mrb[0].mxu0
        %v1227 = vadd.f32 %v1134, %v1226
        %v1228 = vpop.f32.mrb[0].mxu0
        %1229 = vmatprep.mubr.f32.mxu0 0.0
        %1230 = vmatmul.mubr.f32.gmra.mrb[0].mxu0 %v1106
        %v1231 = vpop.f32.mrb[0].mxu0
        %v1232 = vadd.f32 %v1134, %v1231
        %v1233 = vpop.f32.mrb[0].mxu0
        %1234 = vmatprep.mubr.f32.mxu0 0.0
        %1235 = vmatmul.mubr.f32.gmra.mrb[0].mxu0 %v1111
        %v1236 = vpop.f32.mrb[0].mxu0
        %v1237 = vadd.f32 %v1134, %v1236
        %v1238 = vpop.f32.mrb[0].mxu0
        %1239 = vdwg.mxu0
        %v1240 = vadd.f32 %v656, %v1202
        %v1241 = vadd.f32 %v657, %v1207
        %v1242 = vadd.f32 %v658, %v1212
        %v1243 = vadd.f32 %v659, %v1217
        %v1244 = vadd.f32 %v660, %v1222
        %v1245 = vadd.f32 %v661, %v1227
        %v1246 = vadd.f32 %v662, %v1232
        %v1247 = vadd.f32 %v663, %v1237
        %v1248 = vld [vmem:[%s4 + $0x1] sm:$0x1]
        %v1249 = vld [vmem:[%s4 + $0x2] sm:$0x1]
        %1250 = vadd.xlane.f32.xlu0 %v1240
        %v1251 = vpop.xlane.xlu0 %1250
        %1252 = vadd.xlane.f32.xlu0 %v1241
        %v1253 = vpop.xlane.xlu0 %1252
        %1254 = vadd.xlane.f32.xlu0 %v1242
        %v1255 = vpop.xlane.xlu0 %1254
        %1256 = vadd.xlane.f32.xlu0 %v1243
        %v1257 = vpop.xlane.xlu0 %1256
        %1258 = vadd.xlane.f32.xlu0 %v1244
        %v1259 = vpop.xlane.xlu0 %1258
        %1260 = vadd.xlane.f32.xlu0 %v1245
        %v1261 = vpop.xlane.xlu0 %1260
        %1262 = vadd.xlane.f32.xlu0 %v1246
        %v1263 = vpop.xlane.xlu0 %1262
        %1264 = vadd.xlane.f32.xlu0 %v1247
        %v1265 = vpop.xlane.xlu0 %1264
        %v1266 = vrcp.pop 128.0
        %v1267 = vmul.f32 %v1251, %v1266
        %v1268 = vmul.f32 %v1253, %v1266
        %v1269 = vmul.f32 %v1255, %v1266
        %v1270 = vmul.f32 %v1257, %v1266
        %v1271 = vmul.f32 %v1259, %v1266
        %v1272 = vmul.f32 %v1261, %v1266
        %v1273 = vmul.f32 %v1263, %v1266
        %v1274 = vmul.f32 %v1265, %v1266
        %v1275 = vsub.f32 %v1240, %v1267
        %v1276 = vsub.f32 %v1241, %v1268
        %v1277 = vsub.f32 %v1242, %v1269
        %v1278 = vsub.f32 %v1243, %v1270
        %v1279 = vsub.f32 %v1244, %v1271
        %v1280 = vsub.f32 %v1245, %v1272
        %v1281 = vsub.f32 %v1246, %v1273
        %v1282 = vsub.f32 %v1247, %v1274
        %v1283 = vmul.f32 %v1275, %v1275
        %v1284 = vmul.f32 %v1276, %v1276
        %v1285 = vmul.f32 %v1277, %v1277
        %v1286 = vmul.f32 %v1278, %v1278
        %v1287 = vmul.f32 %v1279, %v1279
        %v1288 = vmul.f32 %v1280, %v1280
        %v1289 = vmul.f32 %v1281, %v1281
        %v1290 = vmul.f32 %v1282, %v1282
        %1291 = vadd.xlane.f32.xlu0 %v1283
        %v1292 = vpop.xlane.xlu0 %1291
        %1293 = vadd.xlane.f32.xlu0 %v1284
        %v1294 = vpop.xlane.xlu0 %1293
        %1295 = vadd.xlane.f32.xlu0 %v1285
        %v1296 = vpop.xlane.xlu0 %1295
        %1297 = vadd.xlane.f32.xlu0 %v1286
        %v1298 = vpop.xlane.xlu0 %1297
        %1299 = vadd.xlane.f32.xlu0 %v1287
        %v1300 = vpop.xlane.xlu0 %1299
        %1301 = vadd.xlane.f32.xlu0 %v1288
        %v1302 = vpop.xlane.xlu0 %1301
        %1303 = vadd.xlane.f32.xlu0 %v1289
        %v1304 = vpop.xlane.xlu0 %1303
        %1305 = vadd.xlane.f32.xlu0 %v1290
        %v1306 = vpop.xlane.xlu0 %1305
        %v1307 = vmul.f32 %v1292, %v1266
        %v1308 = vmul.f32 %v1294, %v1266
        %v1309 = vmul.f32 %v1296, %v1266
        %v1310 = vmul.f32 %v1298, %v1266
        %v1311 = vmul.f32 %v1300, %v1266
        %v1312 = vmul.f32 %v1302, %v1266
        %v1313 = vmul.f32 %v1304, %v1266
        %v1314 = vmul.f32 %v1306, %v1266
        %v1315 = vadd.f32 %v1307, 1e-06
        %v1316 = vadd.f32 %v1308, 1e-06
        %v1317 = vadd.f32 %v1309, 1e-06
        %v1318 = vadd.f32 %v1310, 1e-06
        %v1319 = vadd.f32 %v1311, 1e-06
        %v1320 = vadd.f32 %v1312, 1e-06
        %v1321 = vadd.f32 %v1313, 1e-06
        %v1322 = vadd.f32 %v1314, 1e-06
        %v1323 = vrsqrt.pop %v1315
        %v1324 = vrsqrt.pop %v1316
        %v1325 = vrsqrt.pop %v1317
        %v1326 = vrsqrt.pop %v1318
        %v1327 = vrsqrt.pop %v1319
        %v1328 = vrsqrt.pop %v1320
        %v1329 = vrsqrt.pop %v1321
        %v1330 = vrsqrt.pop %v1322
        %v1331 = vmul.f32 %v1275, %v1323
        %v1332 = vmul.f32 %v1276, %v1324
        %v1333 = vmul.f32 %v1277, %v1325
        %v1334 = vmul.f32 %v1278, %v1326
        %v1335 = vmul.f32 %v1279, %v1327
        %v1336 = vmul.f32 %v1280, %v1328
        %v1337 = vmul.f32 %v1281, %v1329
        %v1338 = vmul.f32 %v1282, %v1330
        %v1339 = vlaneseq
        %v1340 = vshrl.u32 %v1339, 7
        %v1341 = vsub.s32 0, %v1340
        %v1342 = vrot.slane %v1248, %v1341
        %v1343 = vmul.f32 %v1331, %v1342
        %v1344 = vmul.f32 %v1332, %v1342
        %v1345 = vmul.f32 %v1333, %v1342
        %v1346 = vmul.f32 %v1334, %v1342
        %v1347 = vmul.f32 %v1335, %v1342
        %v1348 = vmul.f32 %v1336, %v1342
        %v1349 = vmul.f32 %v1337, %v1342
        %v1350 = vmul.f32 %v1338, %v1342
        %v1351 = vlaneseq
        %v1352 = vshrl.u32 %v1351, 7
        %v1353 = vsub.s32 0, %v1352
        %v1354 = vrot.slane %v1249, %v1353
        %v1355 = vadd.f32 %v1343, %v1354
        %v1356 = vadd.f32 %v1344, %v1354
        %v1357 = vadd.f32 %v1345, %v1354
        %v1358 = vadd.f32 %v1346, %v1354
        %v1359 = vadd.f32 %v1347, %v1354
        %v1360 = vadd.f32 %v1348, %v1354
        %v1361 = vadd.f32 %v1349, %v1354
        %v1362 = vadd.f32 %v1350, %v1354
        %v1363 = vld [vmem:[#allocation9] sm:$0xff]
        %v1364 = vld [vmem:[#allocation9 + $0x8] sm:$0xff]
        %v1365 = vld [vmem:[#allocation9 + $0x10] sm:$0xff]
        %v1366 = vld [vmem:[#allocation9 + $0x18] sm:$0xff]
        %v1367 = vld [vmem:[#allocation9 + $0x20] sm:$0xff]
        %v1368 = vld [vmem:[#allocation9 + $0x28] sm:$0xff]
        %v1369 = vld [vmem:[#allocation9 + $0x30] sm:$0xff]
        %v1370 = vld [vmem:[#allocation9 + $0x38] sm:$0xff]
        %v1371 = vld [vmem:[#allocation9 + $0x40] sm:$0xff]
        %v1372 = vld [vmem:[#allocation9 + $0x48] sm:$0xff]
        %v1373 = vld [vmem:[#allocation9 + $0x50] sm:$0xff]
        %v1374 = vld [vmem:[#allocation9 + $0x58] sm:$0xff]
        %v1375 = vld [vmem:[#allocation9 + $0x60] sm:$0xff]
        %v1376 = vld [vmem:[#allocation9 + $0x68] sm:$0xff]
        %v1377 = vld [vmem:[#allocation9 + $0x70] sm:$0xff]
        %v1378 = vld [vmem:[#allocation9 + $0x78] sm:$0xff]
        %v1379 = vld [vmem:[#allocation9 + $0x80] sm:$0xff]
        %v1380 = vld [vmem:[#allocation9 + $0x88] sm:$0xff]
        %v1381 = vld [vmem:[#allocation9 + $0x90] sm:$0xff]
        %v1382 = vld [vmem:[#allocation9 + $0x98] sm:$0xff]
        %v1383 = vld [vmem:[#allocation9 + $0xa0] sm:$0xff]
        %v1384 = vld [vmem:[#allocation9 + $0xa8] sm:$0xff]
        %v1385 = vld [vmem:[#allocation9 + $0xb0] sm:$0xff]
        %v1386 = vld [vmem:[#allocation9 + $0xb8] sm:$0xff]
        %v1387 = vld [vmem:[#allocation9 + $0xc0] sm:$0xff]
        %v1388 = vld [vmem:[#allocation9 + $0xc8] sm:$0xff]
        %v1389 = vld [vmem:[#allocation9 + $0xd0] sm:$0xff]
        %v1390 = vld [vmem:[#allocation9 + $0xd8] sm:$0xff]
        %v1391 = vld [vmem:[#allocation9 + $0xe0] sm:$0xff]
        %v1392 = vld [vmem:[#allocation9 + $0xe8] sm:$0xff]
        %v1393 = vld [vmem:[#allocation9 + $0xf0] sm:$0xff]
        %v1394 = vld [vmem:[#allocation9 + $0xf8] sm:$0xff]
        %v1395 = vld [vmem:[%s6] sm:$0x3]
        %v1397 = vlaneseq
        %v1398 = vshrl.u32 %v1397, 7
        %v1399 = vsub.s32 0, %v1398
        %v1400 = vrot.slane %v1395, %v1399
        %v1401 = vlaneseq
        %v1402 = vshrl.u32 %v1401, 7
        %v1403 = vsub.s32 1, %v1402
        %v1404 = vrot.slane %v1395, %v1403
        %1407 = vmatprep.subr.mxu0 %v1364
        %1408 = vmatpush1.msra.mxu0 %v1363
        %1409 = vmatprep.subr.mxu0 %v1366
        %1410 = vmatpush1.msra.mxu0 %v1365
        %1411 = vmatprep.subr.mxu0 %v1368
        %1412 = vmatpush1.msra.mxu0 %v1367
        %1413 = vmatprep.subr.mxu0 %v1370
        %1414 = vmatpush1.msra.mxu0 %v1369
        %1415 = vmatprep.subr.mxu0 %v1372
        %1416 = vmatpush1.msra.mxu0 %v1371
        %1417 = vmatprep.subr.mxu0 %v1374
        %1418 = vmatpush1.msra.mxu0 %v1373
        %1419 = vmatprep.subr.mxu0 %v1376
        %1420 = vmatpush1.msra.mxu0 %v1375
        %1421 = vmatprep.subr.mxu0 %v1378
        %1422 = vmatpush1.msra.mxu0 %v1377
        %1423 = vmatprep.subr.mxu0 %v1380
        %1424 = vmatpush1.msra.mxu0 %v1379
        %1425 = vmatprep.subr.mxu0 %v1382
        %1426 = vmatpush1.msra.mxu0 %v1381
        %1427 = vmatprep.subr.mxu0 %v1384
        %1428 = vmatpush1.msra.mxu0 %v1383
        %1429 = vmatprep.subr.mxu0 %v1386
        %1430 = vmatpush1.msra.mxu0 %v1385
        %1431 = vmatprep.subr.mxu0 %v1388
        %1432 = vmatpush1.msra.mxu0 %v1387
        %1433 = vmatprep.subr.mxu0 %v1390
        %1434 = vmatpush1.msra.mxu0 %v1389
        %1435 = vmatprep.subr.mxu0 %v1392
        %1436 = vmatpush1.msra.mxu0 %v1391
        %1437 = vmatprep.subr.mxu0 %v1394
        %1438 = vmatpush1.msra.mxu0 %v1393
        %1439 = vmatprep.subr.mxu0 0.0
        %1440 = vmatpush1.msra.mxu0 0.0
        %1441 = vmatprep.subr.mxu0 0.0
        %1442 = vmatpush1.msra.mxu0 0.0
        %1443 = vmatprep.subr.mxu0 0.0
        %1444 = vmatpush1.msra.mxu0 0.0
        %1445 = vmatprep.subr.mxu0 0.0
        %1446 = vmatpush1.msra.mxu0 0.0
        %1447 = vmatprep.subr.mxu0 0.0
        %1448 = vmatpush1.msra.mxu0 0.0
        %1449 = vmatprep.subr.mxu0 0.0
        %1450 = vmatpush1.msra.mxu0 0.0
        %1451 = vmatprep.subr.mxu0 0.0
        %1452 = vmatpush1.msra.mxu0 0.0
        %1453 = vmatprep.subr.mxu0 0.0
        %1454 = vmatpush1.msra.mxu0 0.0
        %1455 = vmatprep.subr.mxu0 0.0
        %1456 = vmatpush1.msra.mxu0 0.0
        %1457 = vmatprep.subr.mxu0 0.0
        %1458 = vmatpush1.msra.mxu0 0.0
        %1459 = vmatprep.subr.mxu0 0.0
        %1460 = vmatpush1.msra.mxu0 0.0
        %1461 = vmatprep.subr.mxu0 0.0
        %1462 = vmatpush1.msra.mxu0 0.0
        %1463 = vmatprep.subr.mxu0 0.0
        %1464 = vmatpush1.msra.mxu0 0.0
        %1465 = vmatprep.subr.mxu0 0.0
        %1466 = vmatpush1.msra.mxu0 0.0
        %1467 = vmatprep.subr.mxu0 0.0
        %1468 = vmatpush1.msra.mxu0 0.0
        %1469 = vmatprep.subr.mxu0 0.0
        %1470 = vmatpush1.msra.mxu0 0.0
        %1471 = vmatprep.mubr.f32.mxu0 0.0
        %1472 = vmatmul.mubr.f32.gmra.mrb[0].mxu0 %v1355
        %v1473 = vpop.f32.mrb[0].mxu0
        %v1474 = vadd.f32 %v1400, %v1473
        %v1475 = vpop.f32.mrb[0].mxu0
        %v1476 = vadd.f32 %v1404, %v1475
        %1477 = vmatprep.mubr.f32.mxu0 0.0
        %1478 = vmatmul.mubr.f32.gmra.mrb[0].mxu0 %v1356
        %v1479 = vpop.f32.mrb[0].mxu0
        %v1480 = vadd.f32 %v1400, %v1479
        %v1481 = vpop.f32.mrb[0].mxu0
        %v1482 = vadd.f32 %v1404, %v1481
        %1483 = vmatprep.mubr.f32.mxu0 0.0
        %1484 = vmatmul.mubr.f32.gmra.mrb[0].mxu0 %v1357
        %v1485 = vpop.f32.mrb[0].mxu0
        %v1486 = vadd.f32 %v1400, %v1485
        %v1487 = vpop.f32.mrb[0].mxu0
        %v1488 = vadd.f32 %v1404, %v1487
        %1489 = vmatprep.mubr.f32.mxu0 0.0
        %1490 = vmatmul.mubr.f32.gmra.mrb[0].mxu0 %v1358
        %v1491 = vpop.f32.mrb[0].mxu0
        %v1492 = vadd.f32 %v1400, %v1491
        %v1493 = vpop.f32.mrb[0].mxu0
        %v1494 = vadd.f32 %v1404, %v1493
        %1495 = vmatprep.mubr.f32.mxu0 0.0
        %1496 = vmatmul.mubr.f32.gmra.mrb[0].mxu0 %v1359
        %v1497 = vpop.f32.mrb[0].mxu0
        %v1498 = vadd.f32 %v1400, %v1497
        %v1499 = vpop.f32.mrb[0].mxu0
        %v1500 = vadd.f32 %v1404, %v1499
        %1501 = vmatprep.mubr.f32.mxu0 0.0
        %1502 = vmatmul.mubr.f32.gmra.mrb[0].mxu0 %v1360
        %v1503 = vpop.f32.mrb[0].mxu0
        %v1504 = vadd.f32 %v1400, %v1503
        %v1505 = vpop.f32.mrb[0].mxu0
        %v1506 = vadd.f32 %v1404, %v1505
        %1507 = vmatprep.mubr.f32.mxu0 0.0
        %1508 = vmatmul.mubr.f32.gmra.mrb[0].mxu0 %v1361
        %v1509 = vpop.f32.mrb[0].mxu0
        %v1510 = vadd.f32 %v1400, %v1509
        %v1511 = vpop.f32.mrb[0].mxu0
        %v1512 = vadd.f32 %v1404, %v1511
        %1513 = vmatprep.mubr.f32.mxu0 0.0
        %1514 = vmatmul.mubr.f32.gmra.mrb[0].mxu0 %v1362
        %v1515 = vpop.f32.mrb[0].mxu0
        %v1516 = vadd.f32 %v1400, %v1515
        %v1517 = vpop.f32.mrb[0].mxu0
        %v1518 = vadd.f32 %v1404, %v1517
        %1519 = vdwg.mxu0
        %v1520 = vmax.f32 %v1474, 0.0
        %v1521 = vmax.f32 %v1476, 0.0
        %v1522 = vmax.f32 %v1480, 0.0
        %v1523 = vmax.f32 %v1482, 0.0
        %v1524 = vmax.f32 %v1486, 0.0
        %v1525 = vmax.f32 %v1488, 0.0
        %v1526 = vmax.f32 %v1492, 0.0
        %v1527 = vmax.f32 %v1494, 0.0
        %v1528 = vmax.f32 %v1498, 0.0
        %v1529 = vmax.f32 %v1500, 0.0
        %v1530 = vmax.f32 %v1504, 0.0
        %v1531 = vmax.f32 %v1506, 0.0
        %v1532 = vmax.f32 %v1510, 0.0
        %v1533 = vmax.f32 %v1512, 0.0
        %v1534 = vmax.f32 %v1516, 0.0
        %v1535 = vmax.f32 %v1518, 0.0
        %v1536 = vld [vmem:[#allocation11] sm:$0xff]
        %v1537 = vld [vmem:[#allocation11 + $0x8] sm:$0xff]
        %v1538 = vld [vmem:[#allocation11 + $0x10] sm:$0xff]
        %v1539 = vld [vmem:[#allocation11 + $0x18] sm:$0xff]
        %v1540 = vld [vmem:[#allocation11 + $0x20] sm:$0xff]
        %v1541 = vld [vmem:[#allocation11 + $0x28] sm:$0xff]
        %v1542 = vld [vmem:[#allocation11 + $0x30] sm:$0xff]
        %v1543 = vld [vmem:[#allocation11 + $0x38] sm:$0xff]
        %v1544 = vld [vmem:[#allocation11 + $0x40] sm:$0xff]
        %v1545 = vld [vmem:[#allocation11 + $0x48] sm:$0xff]
        %v1546 = vld [vmem:[#allocation11 + $0x50] sm:$0xff]
        %v1547 = vld [vmem:[#allocation11 + $0x58] sm:$0xff]
        %v1548 = vld [vmem:[#allocation11 + $0x60] sm:$0xff]
        %v1549 = vld [vmem:[#allocation11 + $0x68] sm:$0xff]
        %v1550 = vld [vmem:[#allocation11 + $0x70] sm:$0xff]
        %v1551 = vld [vmem:[#allocation11 + $0x78] sm:$0xff]
        %v1552 = vld [vmem:[#allocation11 + $0x80] sm:$0xff]
        %v1553 = vld [vmem:[#allocation11 + $0x88] sm:$0xff]
        %v1554 = vld [vmem:[#allocation11 + $0x90] sm:$0xff]
        %v1555 = vld [vmem:[#allocation11 + $0x98] sm:$0xff]
        %v1556 = vld [vmem:[#allocation11 + $0xa0] sm:$0xff]
        %v1557 = vld [vmem:[#allocation11 + $0xa8] sm:$0xff]
        %v1558 = vld [vmem:[#allocation11 + $0xb0] sm:$0xff]
        %v1559 = vld [vmem:[#allocation11 + $0xb8] sm:$0xff]
        %v1560 = vld [vmem:[#allocation11 + $0xc0] sm:$0xff]
        %v1561 = vld [vmem:[#allocation11 + $0xc8] sm:$0xff]
        %v1562 = vld [vmem:[#allocation11 + $0xd0] sm:$0xff]
        %v1563 = vld [vmem:[#allocation11 + $0xd8] sm:$0xff]
        %v1564 = vld [vmem:[#allocation11 + $0xe0] sm:$0xff]
        %v1565 = vld [vmem:[#allocation11 + $0xe8] sm:$0xff]
        %v1566 = vld [vmem:[#allocation11 + $0xf0] sm:$0xff]
        %v1567 = vld [vmem:[#allocation11 + $0xf8] sm:$0xff]
        %v1568 = vld [vmem:[%s4 + $0x5] sm:$0x1]
        %v1569 = vlaneseq
        %v1570 = vshrl.u32 %v1569, 7
        %v1571 = vsub.s32 0, %v1570
        %v1572 = vrot.slane %v1568, %v1571
        %1573 = vmatprep.subr.mxu0 0.0
        %1574 = vmatpush1.msra.mxu0 %v1536
        %1575 = vmatprep.subr.mxu0 0.0
        %1576 = vmatpush1.msra.mxu0 %v1537
        %1577 = vmatprep.subr.mxu0 0.0
        %1578 = vmatpush1.msra.mxu0 %v1538
        %1579 = vmatprep.subr.mxu0 0.0
        %1580 = vmatpush1.msra.mxu0 %v1539
        %1581 = vmatprep.subr.mxu0 0.0
        %1582 = vmatpush1.msra.mxu0 %v1540
        %1583 = vmatprep.subr.mxu0 0.0
        %1584 = vmatpush1.msra.mxu0 %v1541
        %1585 = vmatprep.subr.mxu0 0.0
        %1586 = vmatpush1.msra.mxu0 %v1542
        %1587 = vmatprep.subr.mxu0 0.0
        %1588 = vmatpush1.msra.mxu0 %v1543
        %1589 = vmatprep.subr.mxu0 0.0
        %1590 = vmatpush1.msra.mxu0 %v1544
        %1591 = vmatprep.subr.mxu0 0.0
        %1592 = vmatpush1.msra.mxu0 %v1545
        %1593 = vmatprep.subr.mxu0 0.0
        %1594 = vmatpush1.msra.mxu0 %v1546
        %1595 = vmatprep.subr.mxu0 0.0
        %1596 = vmatpush1.msra.mxu0 %v1547
        %1597 = vmatprep.subr.mxu0 0.0
        %1598 = vmatpush1.msra.mxu0 %v1548
        %1599 = vmatprep.subr.mxu0 0.0
        %1600 = vmatpush1.msra.mxu0 %v1549
        %1601 = vmatprep.subr.mxu0 0.0
        %1602 = vmatpush1.msra.mxu0 %v1550
        %1603 = vmatprep.subr.mxu0 0.0
        %1604 = vmatpush1.msra.mxu0 %v1551
        %1605 = vmatprep.subr.mxu0 0.0
        %1606 = vmatpush1.msra.mxu0 %v1552
        %1607 = vmatprep.subr.mxu0 0.0
        %1608 = vmatpush1.msra.mxu0 %v1553
        %1609 = vmatprep.subr.mxu0 0.0
        %1610 = vmatpush1.msra.mxu0 %v1554
        %1611 = vmatprep.subr.mxu0 0.0
        %1612 = vmatpush1.msra.mxu0 %v1555
        %1613 = vmatprep.subr.mxu0 0.0
        %1614 = vmatpush1.msra.mxu0 %v1556
        %1615 = vmatprep.subr.mxu0 0.0
        %1616 = vmatpush1.msra.mxu0 %v1557
        %1617 = vmatprep.subr.mxu0 0.0
        %1618 = vmatpush1.msra.mxu0 %v1558
        %1619 = vmatprep.subr.mxu0 0.0
        %1620 = vmatpush1.msra.mxu0 %v1559
        %1621 = vmatprep.subr.mxu0 0.0
        %1622 = vmatpush1.msra.mxu0 %v1560
        %1623 = vmatprep.subr.mxu0 0.0
        %1624 = vmatpush1.msra.mxu0 %v1561
        %1625 = vmatprep.subr.mxu0 0.0
        %1626 = vmatpush1.msra.mxu0 %v1562
        %1627 = vmatprep.subr.mxu0 0.0
        %1628 = vmatpush1.msra.mxu0 %v1563
        %1629 = vmatprep.subr.mxu0 0.0
        %1630 = vmatpush1.msra.mxu0 %v1564
        %1631 = vmatprep.subr.mxu0 0.0
        %1632 = vmatpush1.msra.mxu0 %v1565
        %1633 = vmatprep.subr.mxu0 0.0
        %1634 = vmatpush1.msra.mxu0 %v1566
        %1635 = vmatprep.subr.mxu0 0.0
        %1636 = vmatpush1.msra.mxu0 %v1567
        %1637 = vmatprep.mubr.f32.mxu0 %v1521
        %1638 = vmatmul.mubr.f32.gmra.mrb[0].mxu0 %v1520
        %v1639 = vpop.f32.mrb[0].mxu0
        %v1640 = vadd.f32 %v1572, %v1639
        %v1641 = vpop.f32.mrb[0].mxu0
        %1642 = vmatprep.mubr.f32.mxu0 %v1523
        %1643 = vmatmul.mubr.f32.gmra.mrb[0].mxu0 %v1522
        %v1644 = vpop.f32.mrb[0].mxu0
        %v1645 = vadd.f32 %v1572, %v1644
        %v1646 = vpop.f32.mrb[0].mxu0
        %1647 = vmatprep.mubr.f32.mxu0 %v1525
        %1648 = vmatmul.mubr.f32.gmra.mrb[0].mxu0 %v1524
        %v1649 = vpop.f32.mrb[0].mxu0
        %v1650 = vadd.f32 %v1572, %v1649
        %v1651 = vpop.f32.mrb[0].mxu0
        %1652 = vmatprep.mubr.f32.mxu0 %v1527
        %1653 = vmatmul.mubr.f32.gmra.mrb[0].mxu0 %v1526
        %v1654 = vpop.f32.mrb[0].mxu0
        %v1655 = vadd.f32 %v1572, %v1654
        %v1656 = vpop.f32.mrb[0].mxu0
        %1657 = vmatprep.mubr.f32.mxu0 %v1529
        %1658 = vmatmul.mubr.f32.gmra.mrb[0].mxu0 %v1528
        %v1659 = vpop.f32.mrb[0].mxu0
        %v1660 = vadd.f32 %v1572, %v1659
        %v1661 = vpop.f32.mrb[0].mxu0
        %1662 = vmatprep.mubr.f32.mxu0 %v1531
        %1663 = vmatmul.mubr.f32.gmra.mrb[0].mxu0 %v1530
        %v1664 = vpop.f32.mrb[0].mxu0
        %v1665 = vadd.f32 %v1572, %v1664
        %v1666 = vpop.f32.mrb[0].mxu0
        %1667 = vmatprep.mubr.f32.mxu0 %v1533
        %1668 = vmatmul.mubr.f32.gmra.mrb[0].mxu0 %v1532
        %v1669 = vpop.f32.mrb[0].mxu0
        %v1670 = vadd.f32 %v1572, %v1669
        %v1671 = vpop.f32.mrb[0].mxu0
        %1672 = vmatprep.mubr.f32.mxu0 %v1535
        %1673 = vmatmul.mubr.f32.gmra.mrb[0].mxu0 %v1534
        %v1674 = vpop.f32.mrb[0].mxu0
        %v1675 = vadd.f32 %v1572, %v1674
        %v1676 = vpop.f32.mrb[0].mxu0
        %1677 = vdwg.mxu0
        %v1678 = vadd.f32 %v1355, %v1640
        %v1679 = vadd.f32 %v1356, %v1645
        %v1680 = vadd.f32 %v1357, %v1650
        %v1681 = vadd.f32 %v1358, %v1655
        %v1682 = vadd.f32 %v1359, %v1660
        %v1683 = vadd.f32 %v1360, %v1665
        %v1684 = vadd.f32 %v1361, %v1670
        %v1685 = vadd.f32 %v1362, %v1675
        %v1686 = vld [vmem:[%s4 + $0x3] sm:$0x1]
        %v1687 = vld [vmem:[%s4 + $0x4] sm:$0x1]
        %1688 = vadd.xlane.f32.xlu0 %v1678
        %v1689 = vpop.xlane.xlu0 %1688
        %1690 = vadd.xlane.f32.xlu0 %v1679
        %v1691 = vpop.xlane.xlu0 %1690
        %1692 = vadd.xlane.f32.xlu0 %v1680
        %v1693 = vpop.xlane.xlu0 %1692
        %1694 = vadd.xlane.f32.xlu0 %v1681
        %v1695 = vpop.xlane.xlu0 %1694
        %1696 = vadd.xlane.f32.xlu0 %v1682
        %v1697 = vpop.xlane.xlu0 %1696
        %1698 = vadd.xlane.f32.xlu0 %v1683
        %v1699 = vpop.xlane.xlu0 %1698
        %1700 = vadd.xlane.f32.xlu0 %v1684
        %v1701 = vpop.xlane.xlu0 %1700
        %1702 = vadd.xlane.f32.xlu0 %v1685
        %v1703 = vpop.xlane.xlu0 %1702
        %v1704 = vmul.f32 %v1689, %v1266
        %v1705 = vmul.f32 %v1691, %v1266
        %v1706 = vmul.f32 %v1693, %v1266
        %v1707 = vmul.f32 %v1695, %v1266
        %v1708 = vmul.f32 %v1697, %v1266
        %v1709 = vmul.f32 %v1699, %v1266
        %v1710 = vmul.f32 %v1701, %v1266
        %v1711 = vmul.f32 %v1703, %v1266
        %v1712 = vsub.f32 %v1678, %v1704
        %v1713 = vsub.f32 %v1679, %v1705
        %v1714 = vsub.f32 %v1680, %v1706
        %v1715 = vsub.f32 %v1681, %v1707
        %v1716 = vsub.f32 %v1682, %v1708
        %v1717 = vsub.f32 %v1683, %v1709
        %v1718 = vsub.f32 %v1684, %v1710
        %v1719 = vsub.f32 %v1685, %v1711
        %v1720 = vmul.f32 %v1712, %v1712
        %v1721 = vmul.f32 %v1713, %v1713
        %v1722 = vmul.f32 %v1714, %v1714
        %v1723 = vmul.f32 %v1715, %v1715
        %v1724 = vmul.f32 %v1716, %v1716
        %v1725 = vmul.f32 %v1717, %v1717
        %v1726 = vmul.f32 %v1718, %v1718
        %v1727 = vmul.f32 %v1719, %v1719
        %1728 = vadd.xlane.f32.xlu0 %v1720
        %v1729 = vpop.xlane.xlu0 %1728
        %1730 = vadd.xlane.f32.xlu0 %v1721
        %v1731 = vpop.xlane.xlu0 %1730
        %1732 = vadd.xlane.f32.xlu0 %v1722
        %v1733 = vpop.xlane.xlu0 %1732
        %1734 = vadd.xlane.f32.xlu0 %v1723
        %v1735 = vpop.xlane.xlu0 %1734
        %1736 = vadd.xlane.f32.xlu0 %v1724
        %v1737 = vpop.xlane.xlu0 %1736
        %1738 = vadd.xlane.f32.xlu0 %v1725
        %v1739 = vpop.xlane.xlu0 %1738
        %1740 = vadd.xlane.f32.xlu0 %v1726
        %v1741 = vpop.xlane.xlu0 %1740
        %1742 = vadd.xlane.f32.xlu0 %v1727
        %v1743 = vpop.xlane.xlu0 %1742
        %v1744 = vmul.f32 %v1729, %v1266
        %v1745 = vmul.f32 %v1731, %v1266
        %v1746 = vmul.f32 %v1733, %v1266
        %v1747 = vmul.f32 %v1735, %v1266
        %v1748 = vmul.f32 %v1737, %v1266
        %v1749 = vmul.f32 %v1739, %v1266
        %v1750 = vmul.f32 %v1741, %v1266
        %v1751 = vmul.f32 %v1743, %v1266
        %v1752 = vadd.f32 %v1744, 1e-06
        %v1753 = vadd.f32 %v1745, 1e-06
        %v1754 = vadd.f32 %v1746, 1e-06
        %v1755 = vadd.f32 %v1747, 1e-06
        %v1756 = vadd.f32 %v1748, 1e-06
        %v1757 = vadd.f32 %v1749, 1e-06
        %v1758 = vadd.f32 %v1750, 1e-06
        %v1759 = vadd.f32 %v1751, 1e-06
        %v1760 = vrsqrt.pop %v1752
        %v1761 = vrsqrt.pop %v1753
        %v1762 = vrsqrt.pop %v1754
        %v1763 = vrsqrt.pop %v1755
        %v1764 = vrsqrt.pop %v1756
        %v1765 = vrsqrt.pop %v1757
        %v1766 = vrsqrt.pop %v1758
        %v1767 = vrsqrt.pop %v1759
        %v1768 = vmul.f32 %v1712, %v1760
        %v1769 = vmul.f32 %v1713, %v1761
        %v1770 = vmul.f32 %v1714, %v1762
        %v1771 = vmul.f32 %v1715, %v1763
        %v1772 = vmul.f32 %v1716, %v1764
        %v1773 = vmul.f32 %v1717, %v1765
        %v1774 = vmul.f32 %v1718, %v1766
        %v1775 = vmul.f32 %v1719, %v1767
        %v1776 = vlaneseq
        %v1777 = vshrl.u32 %v1776, 7
        %v1778 = vsub.s32 0, %v1777
        %v1779 = vrot.slane %v1686, %v1778
        %v1780 = vmul.f32 %v1768, %v1779
        %v1781 = vmul.f32 %v1769, %v1779
        %v1782 = vmul.f32 %v1770, %v1779
        %v1783 = vmul.f32 %v1771, %v1779
        %v1784 = vmul.f32 %v1772, %v1779
        %v1785 = vmul.f32 %v1773, %v1779
        %v1786 = vmul.f32 %v1774, %v1779
        %v1787 = vmul.f32 %v1775, %v1779
        %v1788 = vlaneseq
        %v1789 = vshrl.u32 %v1788, 7
        %v1790 = vsub.s32 0, %v1789
        %v1791 = vrot.slane %v1687, %v1790
        %v1792 = vadd.f32 %v1780, %v1791
        %v1793 = vadd.f32 %v1781, %v1791
        %v1794 = vadd.f32 %v1782, %v1791
        %v1795 = vadd.f32 %v1783, %v1791
        %v1796 = vadd.f32 %v1784, %v1791
        %v1797 = vadd.f32 %v1785, %v1791
        %v1798 = vadd.f32 %v1786, %v1791
        %v1799 = vadd.f32 %v1787, %v1791
        %1800 = vst [vmem:[%s395] sm:$0xff] %v1792
        %1801 = vst [vmem:[%s395 + $0x8] sm:$0xff] %v1793
        %1802 = vst [vmem:[%s395 + $0x10] sm:$0xff] %v1794
        %1803 = vst [vmem:[%s395 + $0x18] sm:$0xff] %v1795
        %1804 = vst [vmem:[%s395 + $0x20] sm:$0xff] %v1796
        %1805 = vst [vmem:[%s395 + $0x28] sm:$0xff] %v1797
        %1806 = vst [vmem:[%s395 + $0x30] sm:$0xff] %v1798
        %1807 = vst [vmem:[%s395 + $0x38] sm:$0xff] %v1799
        %s1808 = sand.u32 %s222, 1
        %s1809 = scalar_lea.sflag [#allocation5], %s1808
        %s1810 = sand.u32 %s222, 1
        %s1811 = smul.addr %s1810, 64
        %s1812 = scalar_lea.vmem [#allocation12], %s1811
        // Predicated region
        $region77: #{tpu_custom_call.1} parent=51 // pred_check
          %p1813 = pneg %p232
        $region78: #{tpu_custom_call.1} parent=51 // pred_check_branch
          %1815 = sbr.rel (%p1813) target = $region80
        $region79: #{tpu_custom_call.1} parent=51 // pred_region
          %s1816 = smul.u32 8, %s32
          %s1818 = ssub.s32 1024, 1024
          %1819 = vsyncadd %s1809, %s1818
          %s1820 = smul.addr %s31, 16
          %s1821 = sadd.s32 %s1816, %s1820
          %s1822 = smul.addr %s1821, 128
          %s1823 = scalar_lea.hbm %s8, %s1822
          %s1824 = sshll.u32 %s1812, 4
          %s1825 = int_to_ptr.vmem [resolvable:$true] %s1824
          %1830 = dma.vmem_to_hbm [thread:$0]  %s1825, 1024, %s1823, %s1809, 128, 128, 8
        $region80: #{tpu_custom_call.1} parent=51 // pred_fallthru
          _
      $region52: #{tpu_custom_call.1} parent=5 // pred_fallthru
        _
      %p1831 = scmp.le.s32.totalorder 2, %s22
      // Predicated region
      $region81: #{tpu_custom_call.1} parent=5 // pred_check
        %p1832 = pneg %p1831
      $region82: #{tpu_custom_call.1} parent=5 // pred_check_branch
        %1834 = sbr.rel (%p1832) target = $region84
      $region83: #{tpu_custom_call.1} parent=5 // pred_region
        %s1835 = ssub.s32 %s22, 2
        // Predicated region
        $region85: #{tpu_custom_call.1} parent=83 // pred_check
          %p1836 = pneg %p238
        $region86: #{tpu_custom_call.1} parent=83 // pred_check_branch
          %1838 = sbr.rel (%p1836) target = $region88
        $region87: #{tpu_custom_call.1} parent=83 // pred_region
          %s1839 = sand.u32 %s223, 1
          %s1840 = scalar_lea.sflag [#allocation5], %s1839
          %s1841 = sand.u32 %s223, 1
          %s1842 = smul.addr %s1841, 64
          %s1843 = scalar_lea.vmem [#allocation12], %s1842
          %1844 = dma.done %s1840, 1024
        $region88: #{tpu_custom_call.1} parent=83 // pred_fallthru
          _
      $region84: #{tpu_custom_call.1} parent=5 // pred_fallthru
        _
    $region6: #{tpu_custom_call.1} parent=1 // loop_footer
      %s26 = sadd.s32 1, %s22
    $region7: #{tpu_custom_call.1} parent=1 // loop_footer_branch
      %21 = sbr.rel target = $region3
    $region8: #{tpu_custom_call.1} parent=1 // loop_exit
      _
    %1845 = vsyncpa [#allocation4], 1
    %s1846 = scalar_lea.sflag [#allocation4], 1
    %1847 = vsyncpa %s1846, 1
    %1848 = vsyncpa [#allocation7], 1
    %1849 = vsyncpa [#allocation10], 1
    %1850 = vsyncpa [#allocation5], 1
    %s1851 = scalar_lea.sflag [#allocation5], 1
    %1852 = vsyncpa %s1851, 1

</llo_original>
